<compile_context>
chip_gen: v7x
topology: tpu7x:2x2x1
jax: 0.10.0
libtpu: 0.0.40
codegen_flags: <defaults>
</compile_context>

<pallas_src>
import functools

import numpy as np
import jax
import jax.numpy as jnp
from jax import lax
from jax.experimental import pallas as pl
from jax.experimental.pallas import tpu as pltpu

EPS = 1e-5
CP = 8  # padded channel count (sublane alignment)


# ---------------------------------------------------------------------------
# Kernel
# ---------------------------------------------------------------------------
def _basic_block_kernel(x_ref, w_ref, bn_ref, mask_ref, o_ref, *, N, C, H, W):
    HW = H * W
    NHW = N * HW
    Cp = CP

    # ---- unpack packed BN params: (Cp, 4) = [g1 | be1 | g2 | be2] ----------------
    bn = bn_ref[...]
    g1 = bn[:, 0:1]
    be1 = bn[:, 1:2]
    g2 = bn[:, 2:3]
    be2 = bn[:, 3:4]

    # ---- repack input rows (N*C, HW) -> lane-dense, channel-padded (Cp, NHW) -----
    x_rows = x_ref[...]
    xc = jnp.concatenate([x_rows[n * C:(n + 1) * C, :] for n in range(N)], axis=1)
    if Cp > C:
        xc = jnp.concatenate([xc, jnp.zeros((Cp - C, NHW), jnp.float32)], axis=0)

    def tap(a, ky, kx):
        # One 3x3 tap: XLU lane rotation + precomputed halo mask (zero padding).
        dy, dx = ky - 1, kx - 1
        if dy == 0 and dx == 0:
            return a  # center tap: no shift, no mask
        shifted = pltpu.roll(a, (-(dy * W + dx)) % NHW, 1)
        k = ky * 3 + kx
        row = k if k < 4 else k - 1  # mask rows skip the center tap
        return shifted * mask_ref[row:row + 1, :]

    def conv3x3(a, conv_idx):
        # 3 grouped matmuls (one per kernel row), accumulated -> bounded tap liveness.
        acc = None
        for ky in range(3):
            patches = jnp.concatenate([tap(a, ky, kx) for kx in range(3)], axis=0)
            wg = w_ref[(conv_idx * 3 + ky) * Cp:(conv_idx * 3 + ky + 1) * Cp, :]
            part = jnp.dot(wg, patches, preferred_element_type=jnp.float32)
            acc = part if acc is None else acc + part
        return acc

    ones_col = jnp.ones((NHW, 1), jnp.float32)
    inv_n = 1.0 / NHW

    def batchnorm(a, gamma, beta):
        # Training-mode BN over (N,H,W); sums computed on the (idle) MXU.
        s1 = jnp.dot(a, ones_col, preferred_element_type=jnp.float32)       # (Cp, 1)
        s2 = jnp.dot(a * a, ones_col, preferred_element_type=jnp.float32)   # (Cp, 1)
        mean = s1 * inv_n
        var = s2 * inv_n - mean * mean
        scale = gamma * lax.rsqrt(var + EPS)
        shift = beta - mean * scale
        return a * scale + shift  # one fused scale/shift pass

    out = conv3x3(xc, 0)                  # conv bias omitted: cancelled by BN mean
    out = batchnorm(out, g1, be1)
    out = jnp.maximum(out, 0.0)
    out = conv3x3(out, 1)
    out = batchnorm(out, g2, be2)
    out = jnp.maximum(out + xc, 0.0)      # residual add + ReLU

    # Back to (N*C, HW) rows -> full unmasked (8, 256) lane-dense store.
    o_ref[...] = jnp.concatenate(
        [out[:C, n * HW:(n + 1) * HW] for n in range(N)], axis=0)


# ---------------------------------------------------------------------------
# Wrapper + parameter packing (all packing is trace-time / numpy, done once)
# ---------------------------------------------------------------------------
@jax.jit
def basic_block(x_nchw, w_packed, bn_packed, masks):
    N, C, H, W = x_nchw.shape
    x_rows = x_nchw.reshape(N * C, H * W).astype(jnp.float32)  # free reshape, no pad
    kernel = functools.partial(_basic_block_kernel, N=N, C=C, H=H, W=W)
    out_rows = pl.pallas_call(
        kernel,
        out_shape=jax.ShapeDtypeStruct((N * C, H * W), jnp.float32),
        in_specs=[pl.BlockSpec(memory_space=pltpu.MemorySpace.VMEM)] * 4,
        out_specs=pl.BlockSpec(memory_space=pltpu.MemorySpace.VMEM),
    )(x_rows, w_packed, bn_packed, masks)
    return out_rows.reshape(N, C, H, W)


def pack_weights(w1_hwio, w2_hwio, C):
    """Single weight slab (2*3*Cp, 3*Cp): row block (conv*3+ky)*Cp+cout, col kx*Cp+cin.

    Channel dims zero-padded to Cp=8 so kernel slices are sublane-aligned.
    """
    slab = np.zeros((2 * 3 * CP, 3 * CP), np.float32)
    for c_idx, w in enumerate((np.asarray(w1_hwio), np.asarray(w2_hwio))):
        for ky in range(3):
            blk = slab[(c_idx * 3 + ky) * CP:(c_idx * 3 + ky + 1) * CP]
            for kx in range(3):
                blk[:C, kx * CP:kx * CP + C] = w[ky, kx].T  # (Cout, Cin)
    return jnp.asarray(slab)


def pack_bn(g1, be1, g2, be2, C):
    """Single (Cp, 4) BN-parameter slab; padded rows get gamma=0/beta=0 (stay zero)."""
    bn = np.zeros((CP, 4), np.float32)
    bn[:C, 0] = np.asarray(g1)
    bn[:C, 1] = np.asarray(be1)
    bn[:C, 2] = np.asarray(g2)
    bn[:C, 3] = np.asarray(be2)
    return jnp.asarray(bn)


def make_tap_masks(N, H, W):
    """(8, N*H*W) f32 halo-validity masks for the 8 non-center 3x3 taps."""
    HW = H * W
    lane = np.arange(N * HW)
    y = (lane % HW) // W
    x = lane % W
    rows = []
    for k in range(9):
        if k == 4:
            continue
        dy, dx = k // 3 - 1, k % 3 - 1
        m = ((y + dy >= 0) & (y + dy < H) & (x + dx >= 0) & (x + dx < W))
        rows.append(m.astype(np.float32))
    return jnp.asarray(np.stack(rows, axis=0))


# ---------------------------------------------------------------------------
# Pure-JAX reference (conv biases included; BN in training mode, like the module)
# ---------------------------------------------------------------------------
def reference_nchw(x_nchw, w1_hwio, b1, g1, be1, w2_hwio, b2, g2, be2):
    x = jnp.transpose(x_nchw, (0, 2, 3, 1))

    def conv(y, w, b):
        return jax.lax.conv_general_dilated(
            y, w, window_strides=(1, 1), padding='SAME',
            dimension_numbers=('NHWC', 'HWIO', 'NHWC')) + b

    def bn(y, g, be):
        m = jnp.mean(y, axis=(0, 1, 2))
        v = jnp.mean((y - m) ** 2, axis=(0, 1, 2))
        return (y - m) * jax.lax.rsqrt(v + EPS) * g + be

    out = jax.nn.relu(bn(conv(x, w1_hwio, b1), g1, be1))
    out = bn(conv(out, w2_hwio, b2), g2, be2) + x
    out = jax.nn.relu(out)
    return jnp.transpose(out, (0, 3, 1, 2))


if __name__ == "__main__":
    key = jax.random.PRNGKey(0)
    N, C, H, W = 2, 4, 16, 16
    kx_, k1, k2, kb1, kb2, kg1, kg2, kbe1, kbe2 = jax.random.split(key, 9)

    x = jax.random.normal(kx_, (N, C, H, W), jnp.float32)

    # Synthetic parameters with BasicBlock(channel=C) shapes.
    w1_hwio = jax.random.normal(k1, (3, 3, C, C), jnp.float32) * 0.1   # conv1 weight (HWIO)
    w2_hwio = jax.random.normal(k2, (3, 3, C, C), jnp.float32) * 0.1   # conv2 weight (HWIO)
    b1 = jax.random.normal(kb1, (C,), jnp.float32) * 0.1               # conv1 bias
    b2 = jax.random.normal(kb2, (C,), jnp.float32) * 0.1               # conv2 bias
    g1 = 1.0 + 0.1 * jax.random.normal(kg1, (C,), jnp.float32)         # bn1.weight
    be1 = 0.1 * jax.random.normal(kbe1, (C,), jnp.float32)             # bn1.bias
    g2 = 1.0 + 0.1 * jax.random.normal(kg2, (C,), jnp.float32)         # bn2.weight
    be2 = 0.1 * jax.random.normal(kbe2, (C,), jnp.float32)             # bn2.bias

    # Conv biases are NOT passed to the kernel: a per-channel constant added before
    # training-mode BatchNorm is exactly cancelled by the batch-mean subtraction.
    w_packed = pack_weights(w1_hwio, w2_hwio, C)
    bn_packed = pack_bn(g1, be1, g2, be2, C)
    masks = make_tap_masks(N, H, W)

    out = basic_block(x, w_packed, bn_packed, masks)
    out = jax.block_until_ready(out)

    ref = reference_nchw(x, w1_hwio, b1, g1, be1, w2_hwio, b2, g2, be2)
    assert out.shape == x.shape
    max_err = float(jnp.max(jnp.abs(out - ref)))
    assert bool(jnp.allclose(out, ref, atol=2e-3, rtol=2e-3)), f"max_err={max_err}"

    print("KERNEL_OK")
</pallas_src>

<mosaic_0001>
module attributes {stable_mosaic.version = 11 : i64} {
  func.func @_basic_block_kernel(%arg0: memref<8x256xf32, #tpu.memory_space<vmem>>, %arg1: memref<48x24xf32, #tpu.memory_space<vmem>>, %arg2: memref<8x4xf32, #tpu.memory_space<vmem>>, %arg3: memref<8x512xf32, #tpu.memory_space<vmem>>, %arg4: memref<8x256xf32, #tpu.memory_space<vmem>>) attributes {dimension_semantics = [], scalar_prefetch = 0 : i64, scratch_operands = 0 : i64, tpu.core_type = #tpu.core_type<tc>} {
    %c0 = arith.constant 0 : index
    %c0_0 = arith.constant 0 : index
    %0 = vector.load %arg2[%c0, %c0_0] : memref<8x4xf32, #tpu.memory_space<vmem>>, vector<8x4xf32>
    %1 = vector.extract_strided_slice %0 {offsets = [0, 0], sizes = [8, 1], strides = [1, 1]} : vector<8x4xf32> to vector<8x1xf32>
    %2 = vector.extract_strided_slice %0 {offsets = [0, 1], sizes = [8, 1], strides = [1, 1]} : vector<8x4xf32> to vector<8x1xf32>
    %3 = vector.extract_strided_slice %0 {offsets = [0, 2], sizes = [8, 1], strides = [1, 1]} : vector<8x4xf32> to vector<8x1xf32>
    %4 = vector.extract_strided_slice %0 {offsets = [0, 3], sizes = [8, 1], strides = [1, 1]} : vector<8x4xf32> to vector<8x1xf32>
    %c0_1 = arith.constant 0 : index
    %c0_2 = arith.constant 0 : index
    %5 = vector.load %arg0[%c0_1, %c0_2] : memref<8x256xf32, #tpu.memory_space<vmem>>, vector<8x256xf32>
    %6 = vector.extract_strided_slice %5 {offsets = [0, 0], sizes = [4, 256], strides = [1, 1]} : vector<8x256xf32> to vector<4x256xf32>
    %7 = vector.extract_strided_slice %5 {offsets = [4, 0], sizes = [4, 256], strides = [1, 1]} : vector<8x256xf32> to vector<4x256xf32>
    %8 = tpu.concatenate %6, %7 in 1 : vector<4x256xf32>, vector<4x256xf32> -> vector<4x512xf32>
    %cst = arith.constant 0.000000e+00 : f32
    %9 = vector.broadcast %cst : f32 to vector<4x512xf32>
    %10 = tpu.concatenate %8, %9 in 0 : vector<4x512xf32>, vector<4x512xf32> -> vector<8x512xf32>
    %cst_3 = arith.constant 1.000000e+00 : f32
    %11 = vector.broadcast %cst_3 : f32 to vector<512x1xf32>
    %c17_i32 = arith.constant 17 : i32
    %12 = tpu.dynamic_rotate %10 by %c17_i32 dim 1 : vector<8x512xf32>, i32 -> vector<8x512xf32>
    %c0_4 = arith.constant 0 : index
    %c0_5 = arith.constant 0 : index
    %13 = vector.load %arg3[%c0_4, %c0_5] : memref<8x512xf32, #tpu.memory_space<vmem>>, vector<1x512xf32>
    %14 = vector.broadcast %13 : vector<1x512xf32> to vector<8x512xf32>
    %15 = arith.mulf %12, %14 : vector<8x512xf32>
    %c16_i32 = arith.constant 16 : i32
    %16 = tpu.dynamic_rotate %10 by %c16_i32 dim 1 : vector<8x512xf32>, i32 -> vector<8x512xf32>
    %c1 = arith.constant 1 : index
    %c0_6 = arith.constant 0 : index
    %17 = vector.load %arg3[%c1, %c0_6] : memref<8x512xf32, #tpu.memory_space<vmem>>, vector<1x512xf32>
    %18 = vector.broadcast %17 : vector<1x512xf32> to vector<8x512xf32>
    %19 = arith.mulf %16, %18 : vector<8x512xf32>
    %c15_i32 = arith.constant 15 : i32
    %20 = tpu.dynamic_rotate %10 by %c15_i32 dim 1 : vector<8x512xf32>, i32 -> vector<8x512xf32>
    %c2 = arith.constant 2 : index
    %c0_7 = arith.constant 0 : index
    %21 = vector.load %arg3[%c2, %c0_7] : memref<8x512xf32, #tpu.memory_space<vmem>>, vector<1x512xf32>
    %22 = vector.broadcast %21 : vector<1x512xf32> to vector<8x512xf32>
    %23 = arith.mulf %20, %22 : vector<8x512xf32>
    %24 = tpu.concatenate %15, %19, %23 in 0 : vector<8x512xf32>, vector<8x512xf32>, vector<8x512xf32> -> vector<24x512xf32>
    %c0_8 = arith.constant 0 : index
    %c0_9 = arith.constant 0 : index
    %25 = vector.load %arg1[%c0_8, %c0_9] : memref<48x24xf32, #tpu.memory_space<vmem>>, vector<8x24xf32>
    %cst_10 = arith.constant dense<0.000000e+00> : vector<8x512xf32>
    %26 = tpu.matmul %25, %24, %cst_10 {dimension_numbers = #tpu.dot_dimension_numbers<[1], [0], [0], [1], [0, 0, 1, 1], [], []>} : vector<8x24xf32>, vector<24x512xf32>, vector<8x512xf32> -> vector<8x512xf32>
    %c1_i32 = arith.constant 1 : i32
    %27 = tpu.dynamic_rotate %10 by %c1_i32 dim 1 : vector<8x512xf32>, i32 -> vector<8x512xf32>
    %c3 = arith.constant 3 : index
    %c0_11 = arith.constant 0 : index
    %28 = vector.load %arg3[%c3, %c0_11] : memref<8x512xf32, #tpu.memory_space<vmem>>, vector<1x512xf32>
    %29 = vector.broadcast %28 : vector<1x512xf32> to vector<8x512xf32>
    %30 = arith.mulf %27, %29 : vector<8x512xf32>
    %c511_i32 = arith.constant 511 : i32
    %31 = tpu.dynamic_rotate %10 by %c511_i32 dim 1 : vector<8x512xf32>, i32 -> vector<8x512xf32>
    %c4 = arith.constant 4 : index
    %c0_12 = arith.constant 0 : index
    %32 = vector.load %arg3[%c4, %c0_12] : memref<8x512xf32, #tpu.memory_space<vmem>>, vector<1x512xf32>
    %33 = vector.broadcast %32 : vector<1x512xf32> to vector<8x512xf32>
    %34 = arith.mulf %31, %33 : vector<8x512xf32>
    %35 = tpu.concatenate %30, %10, %34 in 0 : vector<8x512xf32>, vector<8x512xf32>, vector<8x512xf32> -> vector<24x512xf32>
    %c8 = arith.constant 8 : index
    %c0_13 = arith.constant 0 : index
    %36 = vector.load %arg1[%c8, %c0_13] : memref<48x24xf32, #tpu.memory_space<vmem>>, vector<8x24xf32>
    %cst_14 = arith.constant dense<0.000000e+00> : vector<8x512xf32>
    %37 = tpu.matmul %36, %35, %cst_14 {dimension_numbers = #tpu.dot_dimension_numbers<[1], [0], [0], [1], [0, 0, 1, 1], [], []>} : vector<8x24xf32>, vector<24x512xf32>, vector<8x512xf32> -> vector<8x512xf32>
    %38 = arith.addf %26, %37 : vector<8x512xf32>
    %c497_i32 = arith.constant 497 : i32
    %39 = tpu.dynamic_rotate %10 by %c497_i32 dim 1 : vector<8x512xf32>, i32 -> vector<8x512xf32>
    %c5 = arith.constant 5 : index
    %c0_15 = arith.constant 0 : index
    %40 = vector.load %arg3[%c5, %c0_15] : memref<8x512xf32, #tpu.memory_space<vmem>>, vector<1x512xf32>
    %41 = vector.broadcast %40 : vector<1x512xf32> to vector<8x512xf32>
    %42 = arith.mulf %39, %41 : vector<8x512xf32>
    %c496_i32 = arith.constant 496 : i32
    %43 = tpu.dynamic_rotate %10 by %c496_i32 dim 1 : vector<8x512xf32>, i32 -> vector<8x512xf32>
    %c6 = arith.constant 6 : index
    %c0_16 = arith.constant 0 : index
    %44 = vector.load %arg3[%c6, %c0_16] : memref<8x512xf32, #tpu.memory_space<vmem>>, vector<1x512xf32>
    %45 = vector.broadcast %44 : vector<1x512xf32> to vector<8x512xf32>
    %46 = arith.mulf %43, %45 : vector<8x512xf32>
    %c495_i32 = arith.constant 495 : i32
    %47 = tpu.dynamic_rotate %10 by %c495_i32 dim 1 : vector<8x512xf32>, i32 -> vector<8x512xf32>
    %c7 = arith.constant 7 : index
    %c0_17 = arith.constant 0 : index
    %48 = vector.load %arg3[%c7, %c0_17] : memref<8x512xf32, #tpu.memory_space<vmem>>, vector<1x512xf32>
    %49 = vector.broadcast %48 : vector<1x512xf32> to vector<8x512xf32>
    %50 = arith.mulf %47, %49 : vector<8x512xf32>
    %51 = tpu.concatenate %42, %46, %50 in 0 : vector<8x512xf32>, vector<8x512xf32>, vector<8x512xf32> -> vector<24x512xf32>
    %c16 = arith.constant 16 : index
    %c0_18 = arith.constant 0 : index
    %52 = vector.load %arg1[%c16, %c0_18] : memref<48x24xf32, #tpu.memory_space<vmem>>, vector<8x24xf32>
    %cst_19 = arith.constant dense<0.000000e+00> : vector<8x512xf32>
    %53 = tpu.matmul %52, %51, %cst_19 {dimension_numbers = #tpu.dot_dimension_numbers<[1], [0], [0], [1], [0, 0, 1, 1], [], []>} : vector<8x24xf32>, vector<24x512xf32>, vector<8x512xf32> -> vector<8x512xf32>
    %54 = arith.addf %38, %53 : vector<8x512xf32>
    %cst_20 = arith.constant dense<0.000000e+00> : vector<8x1xf32>
    %55 = tpu.matmul %54, %11, %cst_20 {dimension_numbers = #tpu.dot_dimension_numbers<[1], [0], [0], [1], [0, 0, 1, 1], [], []>} : vector<8x512xf32>, vector<512x1xf32>, vector<8x1xf32> -> vector<8x1xf32>
    %56 = arith.mulf %54, %54 : vector<8x512xf32>
    %cst_21 = arith.constant dense<0.000000e+00> : vector<8x1xf32>
    %57 = tpu.matmul %56, %11, %cst_21 {dimension_numbers = #tpu.dot_dimension_numbers<[1], [0], [0], [1], [0, 0, 1, 1], [], []>} : vector<8x512xf32>, vector<512x1xf32>, vector<8x1xf32> -> vector<8x1xf32>
    %cst_22 = arith.constant 0.001953125 : f32
    %58 = vector.broadcast %cst_22 : f32 to vector<8x1xf32>
    %59 = arith.mulf %55, %58 : vector<8x1xf32>
    %cst_23 = arith.constant 0.001953125 : f32
    %60 = vector.broadcast %cst_23 : f32 to vector<8x1xf32>
    %61 = arith.mulf %57, %60 : vector<8x1xf32>
    %62 = arith.mulf %59, %59 : vector<8x1xf32>
    %63 = arith.subf %61, %62 : vector<8x1xf32>
    %cst_24 = arith.constant 9.99999974E-6 : f32
    %64 = vector.broadcast %cst_24 : f32 to vector<8x1xf32>
    %65 = arith.addf %63, %64 : vector<8x1xf32>
    %66 = math.rsqrt %65 : vector<8x1xf32>
    %67 = arith.mulf %1, %66 : vector<8x1xf32>
    %68 = arith.mulf %59, %67 : vector<8x1xf32>
    %69 = arith.subf %2, %68 : vector<8x1xf32>
    %70 = vector.broadcast %67 : vector<8x1xf32> to vector<8x512xf32>
    %71 = arith.mulf %54, %70 : vector<8x512xf32>
    %72 = vector.broadcast %69 : vector<8x1xf32> to vector<8x512xf32>
    %73 = arith.addf %71, %72 : vector<8x512xf32>
    %cst_25 = arith.constant 0.000000e+00 : f32
    %74 = vector.broadcast %cst_25 : f32 to vector<8x512xf32>
    %75 = arith.maximumf %73, %74 : vector<8x512xf32>
    %c17_i32_26 = arith.constant 17 : i32
    %76 = tpu.dynamic_rotate %75 by %c17_i32_26 dim 1 : vector<8x512xf32>, i32 -> vector<8x512xf32>
    %c0_27 = arith.constant 0 : index
    %c0_28 = arith.constant 0 : index
    %77 = vector.load %arg3[%c0_27, %c0_28] : memref<8x512xf32, #tpu.memory_space<vmem>>, vector<1x512xf32>
    %78 = vector.broadcast %77 : vector<1x512xf32> to vector<8x512xf32>
    %79 = arith.mulf %76, %78 : vector<8x512xf32>
    %c16_i32_29 = arith.constant 16 : i32
    %80 = tpu.dynamic_rotate %75 by %c16_i32_29 dim 1 : vector<8x512xf32>, i32 -> vector<8x512xf32>
    %c1_30 = arith.constant 1 : index
    %c0_31 = arith.constant 0 : index
    %81 = vector.load %arg3[%c1_30, %c0_31] : memref<8x512xf32, #tpu.memory_space<vmem>>, vector<1x512xf32>
    %82 = vector.broadcast %81 : vector<1x512xf32> to vector<8x512xf32>
    %83 = arith.mulf %80, %82 : vector<8x512xf32>
    %c15_i32_32 = arith.constant 15 : i32
    %84 = tpu.dynamic_rotate %75 by %c15_i32_32 dim 1 : vector<8x512xf32>, i32 -> vector<8x512xf32>
    %c2_33 = arith.constant 2 : index
    %c0_34 = arith.constant 0 : index
    %85 = vector.load %arg3[%c2_33, %c0_34] : memref<8x512xf32, #tpu.memory_space<vmem>>, vector<1x512xf32>
    %86 = vector.broadcast %85 : vector<1x512xf32> to vector<8x512xf32>
    %87 = arith.mulf %84, %86 : vector<8x512xf32>
    %88 = tpu.concatenate %79, %83, %87 in 0 : vector<8x512xf32>, vector<8x512xf32>, vector<8x512xf32> -> vector<24x512xf32>
    %c24 = arith.constant 24 : index
    %c0_35 = arith.constant 0 : index
    %89 = vector.load %arg1[%c24, %c0_35] : memref<48x24xf32, #tpu.memory_space<vmem>>, vector<8x24xf32>
    %cst_36 = arith.constant dense<0.000000e+00> : vector<8x512xf32>
    %90 = tpu.matmul %89, %88, %cst_36 {dimension_numbers = #tpu.dot_dimension_numbers<[1], [0], [0], [1], [0, 0, 1, 1], [], []>} : vector<8x24xf32>, vector<24x512xf32>, vector<8x512xf32> -> vector<8x512xf32>
    %c1_i32_37 = arith.constant 1 : i32
    %91 = tpu.dynamic_rotate %75 by %c1_i32_37 dim 1 : vector<8x512xf32>, i32 -> vector<8x512xf32>
    %c3_38 = arith.constant 3 : index
    %c0_39 = arith.constant 0 : index
    %92 = vector.load %arg3[%c3_38, %c0_39] : memref<8x512xf32, #tpu.memory_space<vmem>>, vector<1x512xf32>
    %93 = vector.broadcast %92 : vector<1x512xf32> to vector<8x512xf32>
    %94 = arith.mulf %91, %93 : vector<8x512xf32>
    %c511_i32_40 = arith.constant 511 : i32
    %95 = tpu.dynamic_rotate %75 by %c511_i32_40 dim 1 : vector<8x512xf32>, i32 -> vector<8x512xf32>
    %c4_41 = arith.constant 4 : index
    %c0_42 = arith.constant 0 : index
    %96 = vector.load %arg3[%c4_41, %c0_42] : memref<8x512xf32, #tpu.memory_space<vmem>>, vector<1x512xf32>
    %97 = vector.broadcast %96 : vector<1x512xf32> to vector<8x512xf32>
    %98 = arith.mulf %95, %97 : vector<8x512xf32>
    %99 = tpu.concatenate %94, %75, %98 in 0 : vector<8x512xf32>, vector<8x512xf32>, vector<8x512xf32> -> vector<24x512xf32>
    %c32 = arith.constant 32 : index
    %c0_43 = arith.constant 0 : index
    %100 = vector.load %arg1[%c32, %c0_43] : memref<48x24xf32, #tpu.memory_space<vmem>>, vector<8x24xf32>
    %cst_44 = arith.constant dense<0.000000e+00> : vector<8x512xf32>
    %101 = tpu.matmul %100, %99, %cst_44 {dimension_numbers = #tpu.dot_dimension_numbers<[1], [0], [0], [1], [0, 0, 1, 1], [], []>} : vector<8x24xf32>, vector<24x512xf32>, vector<8x512xf32> -> vector<8x512xf32>
    %102 = arith.addf %90, %101 : vector<8x512xf32>
    %c497_i32_45 = arith.constant 497 : i32
    %103 = tpu.dynamic_rotate %75 by %c497_i32_45 dim 1 : vector<8x512xf32>, i32 -> vector<8x512xf32>
    %c5_46 = arith.constant 5 : index
    %c0_47 = arith.constant 0 : index
    %104 = vector.load %arg3[%c5_46, %c0_47] : memref<8x512xf32, #tpu.memory_space<vmem>>, vector<1x512xf32>
    %105 = vector.broadcast %104 : vector<1x512xf32> to vector<8x512xf32>
    %106 = arith.mulf %103, %105 : vector<8x512xf32>
    %c496_i32_48 = arith.constant 496 : i32
    %107 = tpu.dynamic_rotate %75 by %c496_i32_48 dim 1 : vector<8x512xf32>, i32 -> vector<8x512xf32>
    %c6_49 = arith.constant 6 : index
    %c0_50 = arith.constant 0 : index
    %108 = vector.load %arg3[%c6_49, %c0_50] : memref<8x512xf32, #tpu.memory_space<vmem>>, vector<1x512xf32>
    %109 = vector.broadcast %108 : vector<1x512xf32> to vector<8x512xf32>
    %110 = arith.mulf %107, %109 : vector<8x512xf32>
    %c495_i32_51 = arith.constant 495 : i32
    %111 = tpu.dynamic_rotate %75 by %c495_i32_51 dim 1 : vector<8x512xf32>, i32 -> vector<8x512xf32>
    %c7_52 = arith.constant 7 : index
    %c0_53 = arith.constant 0 : index
    %112 = vector.load %arg3[%c7_52, %c0_53] : memref<8x512xf32, #tpu.memory_space<vmem>>, vector<1x512xf32>
    %113 = vector.broadcast %112 : vector<1x512xf32> to vector<8x512xf32>
    %114 = arith.mulf %111, %113 : vector<8x512xf32>
    %115 = tpu.concatenate %106, %110, %114 in 0 : vector<8x512xf32>, vector<8x512xf32>, vector<8x512xf32> -> vector<24x512xf32>
    %c40 = arith.constant 40 : index
    %c0_54 = arith.constant 0 : index
    %116 = vector.load %arg1[%c40, %c0_54] : memref<48x24xf32, #tpu.memory_space<vmem>>, vector<8x24xf32>
    %cst_55 = arith.constant dense<0.000000e+00> : vector<8x512xf32>
    %117 = tpu.matmul %116, %115, %cst_55 {dimension_numbers = #tpu.dot_dimension_numbers<[1], [0], [0], [1], [0, 0, 1, 1], [], []>} : vector<8x24xf32>, vector<24x512xf32>, vector<8x512xf32> -> vector<8x512xf32>
    %118 = arith.addf %102, %117 : vector<8x512xf32>
    %cst_56 = arith.constant dense<0.000000e+00> : vector<8x1xf32>
    %119 = tpu.matmul %118, %11, %cst_56 {dimension_numbers = #tpu.dot_dimension_numbers<[1], [0], [0], [1], [0, 0, 1, 1], [], []>} : vector<8x512xf32>, vector<512x1xf32>, vector<8x1xf32> -> vector<8x1xf32>
    %120 = arith.mulf %118, %118 : vector<8x512xf32>
    %cst_57 = arith.constant dense<0.000000e+00> : vector<8x1xf32>
    %121 = tpu.matmul %120, %11, %cst_57 {dimension_numbers = #tpu.dot_dimension_numbers<[1], [0], [0], [1], [0, 0, 1, 1], [], []>} : vector<8x512xf32>, vector<512x1xf32>, vector<8x1xf32> -> vector<8x1xf32>
    %cst_58 = arith.constant 0.001953125 : f32
    %122 = vector.broadcast %cst_58 : f32 to vector<8x1xf32>
    %123 = arith.mulf %119, %122 : vector<8x1xf32>
    %cst_59 = arith.constant 0.001953125 : f32
    %124 = vector.broadcast %cst_59 : f32 to vector<8x1xf32>
    %125 = arith.mulf %121, %124 : vector<8x1xf32>
    %126 = arith.mulf %123, %123 : vector<8x1xf32>
    %127 = arith.subf %125, %126 : vector<8x1xf32>
    %cst_60 = arith.constant 9.99999974E-6 : f32
    %128 = vector.broadcast %cst_60 : f32 to vector<8x1xf32>
    %129 = arith.addf %127, %128 : vector<8x1xf32>
    %130 = math.rsqrt %129 : vector<8x1xf32>
    %131 = arith.mulf %3, %130 : vector<8x1xf32>
    %132 = arith.mulf %123, %131 : vector<8x1xf32>
    %133 = arith.subf %4, %132 : vector<8x1xf32>
    %134 = vector.broadcast %131 : vector<8x1xf32> to vector<8x512xf32>
    %135 = arith.mulf %118, %134 : vector<8x512xf32>
    %136 = vector.broadcast %133 : vector<8x1xf32> to vector<8x512xf32>
    %137 = arith.addf %135, %136 : vector<8x512xf32>
    %138 = arith.addf %137, %10 : vector<8x512xf32>
    %cst_61 = arith.constant 0.000000e+00 : f32
    %139 = vector.broadcast %cst_61 : f32 to vector<8x512xf32>
    %140 = arith.maximumf %138, %139 : vector<8x512xf32>
    %141 = vector.extract_strided_slice %140 {offsets = [0, 0], sizes = [4, 256], strides = [1, 1]} : vector<8x512xf32> to vector<4x256xf32>
    %142 = vector.extract_strided_slice %140 {offsets = [0, 256], sizes = [4, 256], strides = [1, 1]} : vector<8x512xf32> to vector<4x256xf32>
    %143 = tpu.concatenate %141, %142 in 0 : vector<4x256xf32>, vector<4x256xf32> -> vector<8x256xf32>
    %c0_62 = arith.constant 0 : index
    %c0_63 = arith.constant 0 : index
    %144 = vector.load %arg4[%c0_62, %c0_63] : memref<8x256xf32, #tpu.memory_space<vmem>>, vector<8x256xf32>
    tpu.vector_store %arg4[%c0_62, %c0_63], %143 {strides = array<i32>} : memref<8x256xf32, #tpu.memory_space<vmem>>, vector<8x256xf32>,
    return
  }
}

</mosaic_0001>

<llo_original>
// kernel: basic_block.1
$region0: #{basic_block.1}
  #allocation0 [shape = 'u32[]', space=smem, size = 0x4, offset = 0x4, fixed_abs, tag = 'smem constant byte address 0x4 - core index']
  #allocation1 [shape = 'u32[144,128]{1,0:T(1,128)}', space=vmem, size = 0x12000, scoped, tag = 'internal scratch']
  %s0 = inlined_call_operand.vmem [shape: f32[8,256], index: 0, kind: input, shape index: {}]
  %s1 = inlined_call_operand.vmem [shape: f32[48,24], index: 1, kind: input, shape index: {}]
  %s2 = inlined_call_operand.vmem [shape: f32[8,4], index: 2, kind: input, shape index: {}]
  %s3 = inlined_call_operand.vmem [shape: f32[8,512], index: 3, kind: input, shape index: {}]
  %s4 = inlined_call_operand.vmem [shape: f32[8,256], index: 4, kind: output, shape index: {}]
  %s5 = sld [smem:[#allocation0]]
  $region26: #{basic_block.1} parent=0
    _
  %s7 = ssub.s32 1, %s5
  %s8 = scalar_select 0, %s7, %s5
  // Predicated region
  $region2: #{basic_block.1} parent=0 // pred_check
    _
  $region3: #{basic_block.1} parent=0 // pred_check_branch
    %10 = sbr.rel (0) target = $region5
  $region4: #{basic_block.1} parent=0 // pred_region
    _
  $region5: #{basic_block.1} parent=0 // pred_fallthru
    _
  // Predicated region
  $region6: #{basic_block.1} parent=0 // pred_check
    _
  $region7: #{basic_block.1} parent=0 // pred_check_branch
    %12 = sbr.rel (0) target = $region9
  $region8: #{basic_block.1} parent=0 // pred_region
    _
  $region9: #{basic_block.1} parent=0 // pred_fallthru
    _
  // Predicated region
  $region10: #{basic_block.1} parent=0 // pred_check
    _
  $region11: #{basic_block.1} parent=0 // pred_check_branch
    %14 = sbr.rel (0) target = $region13
  $region12: #{basic_block.1} parent=0 // pred_region
    _
  $region13: #{basic_block.1} parent=0 // pred_fallthru
    _
  // Predicated region
  $region14: #{basic_block.1} parent=0 // pred_check
    _
  $region15: #{basic_block.1} parent=0 // pred_check_branch
    %16 = sbr.rel (0) target = $region17
  $region16: #{basic_block.1} parent=0 // pred_region
    _
  $region17: #{basic_block.1} parent=0 // pred_fallthru
    _
  %v17 = vld [vmem:[%s2] sm:$0xff]
  %v18 = vld [vmem:[%s0] sm:$0xff]
  %v19 = vld [vmem:[%s0 + $0x8] sm:$0xff]
  %v22 = vrot.slane %v18, 4
  %v23 = vrot.slane %v19, 4
  %vm26 = vcmask 1043456
  %v27 = vsel %vm26, %v18, 0.0
  %v28 = vsel %vm26, %v19, 0.0
  %v29 = vsel %vm26, %v22, 0.0
  %v30 = vsel %vm26, %v23, 0.0
  %31 = vrot.lane.b32.xlu0 %v27, 17
  %v32 = vpop.permute.xlu0 %31
  %33 = vrot.lane.b32.xlu0 %v28, 17
  %v34 = vpop.permute.xlu0 %33
  %35 = vrot.lane.b32.xlu0 %v29, 17
  %v36 = vpop.permute.xlu0 %35
  %37 = vrot.lane.b32.xlu0 %v30, 17
  %v38 = vpop.permute.xlu0 %37
  %v39 = vlaneseq
  %v40 = vand.u32 %v39, 127
  %vm41 = vcmp.lt.s32.totalorder %v40, 17
  %v42 = vsel %vm41, %v36, %v38
  %v43 = vsel %vm41, %v34, %v36
  %v44 = vsel %vm41, %v32, %v34
  %v45 = vsel %vm41, %v38, %v32
  %v46 = vld [vmem:[%s3] ss:$8 sm:$0xf]
  %v48 = vlaneseq
  %v49 = vshrl.u32 %v48, 7
  %v50 = vsub.s32 0, %v49
  %v51 = vrot.slane %v46, %v50
  %v52 = vlaneseq
  %v53 = vshrl.u32 %v52, 7
  %v54 = vsub.s32 1, %v53
  %v55 = vrot.slane %v46, %v54
  %v56 = vlaneseq
  %v57 = vshrl.u32 %v56, 7
  %v58 = vsub.s32 2, %v57
  %v59 = vrot.slane %v46, %v58
  %v60 = vlaneseq
  %v61 = vshrl.u32 %v60, 7
  %v62 = vsub.s32 3, %v61
  %v63 = vrot.slane %v46, %v62
  %v68 = vmul.f32 %v45, %v51
  %v69 = vmul.f32 %v44, %v55
  %v70 = vmul.f32 %v43, %v59
  %v71 = vmul.f32 %v42, %v63
  %72 = vrot.lane.b32.xlu0 %v27, 16
  %v73 = vpop.permute.xlu0 %72
  %74 = vrot.lane.b32.xlu0 %v28, 16
  %v75 = vpop.permute.xlu0 %74
  %76 = vrot.lane.b32.xlu0 %v29, 16
  %v77 = vpop.permute.xlu0 %76
  %78 = vrot.lane.b32.xlu0 %v30, 16
  %v79 = vpop.permute.xlu0 %78
  %vm80 = vcmp.lt.s32.totalorder %v40, 16
  %v81 = vsel %vm80, %v77, %v79
  %v82 = vsel %vm80, %v75, %v77
  %v83 = vsel %vm80, %v73, %v75
  %v84 = vsel %vm80, %v79, %v73
  %s85 = scalar_lea.vmem %s3, 1
  %v86 = vld [vmem:[%s85] ss:$8 sm:$0xf]
  %v88 = vlaneseq
  %v89 = vshrl.u32 %v88, 7
  %v90 = vsub.s32 0, %v89
  %v91 = vrot.slane %v86, %v90
  %v92 = vlaneseq
  %v93 = vshrl.u32 %v92, 7
  %v94 = vsub.s32 1, %v93
  %v95 = vrot.slane %v86, %v94
  %v96 = vlaneseq
  %v97 = vshrl.u32 %v96, 7
  %v98 = vsub.s32 2, %v97
  %v99 = vrot.slane %v86, %v98
  %v100 = vlaneseq
  %v101 = vshrl.u32 %v100, 7
  %v102 = vsub.s32 3, %v101
  %v103 = vrot.slane %v86, %v102
  %v108 = vmul.f32 %v84, %v91
  %v109 = vmul.f32 %v83, %v95
  %v110 = vmul.f32 %v82, %v99
  %v111 = vmul.f32 %v81, %v103
  %112 = vrot.lane.b32.xlu0 %v27, 15
  %v113 = vpop.permute.xlu0 %112
  %114 = vrot.lane.b32.xlu0 %v28, 15
  %v115 = vpop.permute.xlu0 %114
  %116 = vrot.lane.b32.xlu0 %v29, 15
  %v117 = vpop.permute.xlu0 %116
  %118 = vrot.lane.b32.xlu0 %v30, 15
  %v119 = vpop.permute.xlu0 %118
  %vm120 = vcmp.lt.s32.totalorder %v40, 15
  %v121 = vsel %vm120, %v117, %v119
  %v122 = vsel %vm120, %v115, %v117
  %v123 = vsel %vm120, %v113, %v115
  %v124 = vsel %vm120, %v119, %v113
  %s125 = scalar_lea.vmem %s3, 2
  %v126 = vld [vmem:[%s125] ss:$8 sm:$0xf]
  %v128 = vlaneseq
  %v129 = vshrl.u32 %v128, 7
  %v130 = vsub.s32 0, %v129
  %v131 = vrot.slane %v126, %v130
  %v132 = vlaneseq
  %v133 = vshrl.u32 %v132, 7
  %v134 = vsub.s32 1, %v133
  %v135 = vrot.slane %v126, %v134
  %v136 = vlaneseq
  %v137 = vshrl.u32 %v136, 7
  %v138 = vsub.s32 2, %v137
  %v139 = vrot.slane %v126, %v138
  %v140 = vlaneseq
  %v141 = vshrl.u32 %v140, 7
  %v142 = vsub.s32 3, %v141
  %v143 = vrot.slane %v126, %v142
  %v148 = vmul.f32 %v124, %v131
  %v149 = vmul.f32 %v123, %v135
  %v150 = vmul.f32 %v122, %v139
  %v151 = vmul.f32 %v121, %v143
  %v152 = vld [vmem:[%s1] sm:$0xff]
  %153 = vrot.lane.b32.xlu0 %v27, 1
  %v154 = vpop.permute.xlu0 %153
  %155 = vrot.lane.b32.xlu0 %v28, 1
  %v156 = vpop.permute.xlu0 %155
  %157 = vrot.lane.b32.xlu0 %v29, 1
  %v158 = vpop.permute.xlu0 %157
  %159 = vrot.lane.b32.xlu0 %v30, 1
  %v160 = vpop.permute.xlu0 %159
  %vm161 = vcmp.lt.s32.totalorder %v40, 1
  %v162 = vsel %vm161, %v158, %v160
  %v163 = vsel %vm161, %v156, %v158
  %v164 = vsel %vm161, %v154, %v156
  %v165 = vsel %vm161, %v160, %v154
  %s166 = scalar_lea.vmem %s3, 3
  %v167 = vld [vmem:[%s166] ss:$8 sm:$0xf]
  %v169 = vlaneseq
  %v170 = vshrl.u32 %v169, 7
  %v171 = vsub.s32 0, %v170
  %v172 = vrot.slane %v167, %v171
  %v173 = vlaneseq
  %v174 = vshrl.u32 %v173, 7
  %v175 = vsub.s32 1, %v174
  %v176 = vrot.slane %v167, %v175
  %v177 = vlaneseq
  %v178 = vshrl.u32 %v177, 7
  %v179 = vsub.s32 2, %v178
  %v180 = vrot.slane %v167, %v179
  %v181 = vlaneseq
  %v182 = vshrl.u32 %v181, 7
  %v183 = vsub.s32 3, %v182
  %v184 = vrot.slane %v167, %v183
  %v189 = vmul.f32 %v165, %v172
  %v190 = vmul.f32 %v164, %v176
  %v191 = vmul.f32 %v163, %v180
  %v192 = vmul.f32 %v162, %v184
  %193 = vrot.lane.b32.xlu0 %v27, 127
  %v194 = vpop.permute.xlu0 %193
  %195 = vrot.lane.b32.xlu0 %v28, 127
  %v196 = vpop.permute.xlu0 %195
  %197 = vrot.lane.b32.xlu0 %v29, 127
  %v198 = vpop.permute.xlu0 %197
  %199 = vrot.lane.b32.xlu0 %v30, 127
  %v200 = vpop.permute.xlu0 %199
  %vm201 = vcmp.lt.s32.totalorder %v40, 127
  %v202 = vsel %vm201, %v198, %v200
  %v203 = vsel %vm201, %v196, %v198
  %v204 = vsel %vm201, %v194, %v196
  %v205 = vsel %vm201, %v200, %v194
  %s206 = scalar_lea.vmem %s3, 4
  %v207 = vld [vmem:[%s206] ss:$8 sm:$0xf]
  %v209 = vlaneseq
  %v210 = vshrl.u32 %v209, 7
  %v211 = vsub.s32 0, %v210
  %v212 = vrot.slane %v207, %v211
  %v213 = vlaneseq
  %v214 = vshrl.u32 %v213, 7
  %v215 = vsub.s32 1, %v214
  %v216 = vrot.slane %v207, %v215
  %v217 = vlaneseq
  %v218 = vshrl.u32 %v217, 7
  %v219 = vsub.s32 2, %v218
  %v220 = vrot.slane %v207, %v219
  %v221 = vlaneseq
  %v222 = vshrl.u32 %v221, 7
  %v223 = vsub.s32 3, %v222
  %v224 = vrot.slane %v207, %v223
  %v229 = vmul.f32 %v204, %v212
  %v230 = vmul.f32 %v203, %v216
  %v231 = vmul.f32 %v202, %v220
  %v232 = vmul.f32 %v205, %v224
  %v233 = vld [vmem:[%s1 + $0x8] sm:$0xff]
  %vm234 = vcmask 195584
  %v236 = vsel %vm234, %v233, 0
  %238 = vmatprep.subr.mxu0 %v190
  %239 = vmatpush1.msra.mxu0 %v189
  %240 = vmatprep.subr.mxu0 %v28
  %241 = vmatpush1.msra.mxu0 %v27
  %242 = vmatprep.subr.mxu0 %v230
  %243 = vmatpush1.msra.mxu0 %v229
  %244 = vmatprep.subr.mxu0 0.0
  %245 = vmatpush1.msra.mxu0 0.0
  %246 = vmatprep.subr.mxu0 0.0
  %247 = vmatpush1.msra.mxu0 0.0
  %248 = vmatprep.subr.mxu0 0.0
  %249 = vmatpush1.msra.mxu0 0.0
  %250 = vmatprep.subr.mxu0 0.0
  %251 = vmatpush1.msra.mxu0 0.0
  %252 = vmatprep.subr.mxu0 0.0
  %253 = vmatpush1.msra.mxu0 0.0
  %254 = vmatprep.subr.mxu0 0.0
  %255 = vmatpush1.msra.mxu0 0.0
  %256 = vmatprep.subr.mxu0 0.0
  %257 = vmatpush1.msra.mxu0 0.0
  %258 = vmatprep.subr.mxu0 0.0
  %259 = vmatpush1.msra.mxu0 0.0
  %260 = vmatprep.subr.mxu0 0.0
  %261 = vmatpush1.msra.mxu0 0.0
  %262 = vmatprep.subr.mxu0 0.0
  %263 = vmatpush1.msra.mxu0 0.0
  %264 = vmatprep.subr.mxu0 0.0
  %265 = vmatpush1.msra.mxu0 0.0
  %266 = vmatprep.subr.mxu0 0.0
  %267 = vmatpush1.msra.mxu0 0.0
  %268 = vmatprep.subr.mxu0 0.0
  %269 = vmatpush1.msra.mxu0 0.0
  %270 = vmatprep.subr.mxu0 0.0
  %271 = vmatpush1.msra.mxu0 0.0
  %272 = vmatprep.subr.mxu0 0.0
  %273 = vmatpush1.msra.mxu0 0.0
  %274 = vmatprep.subr.mxu0 0.0
  %275 = vmatpush1.msra.mxu0 0.0
  %276 = vmatprep.subr.mxu0 0.0
  %277 = vmatpush1.msra.mxu0 0.0
  %278 = vmatprep.subr.mxu0 0.0
  %279 = vmatpush1.msra.mxu0 0.0
  %280 = vmatprep.subr.mxu0 0.0
  %281 = vmatpush1.msra.mxu0 0.0
  %282 = vmatprep.subr.mxu0 0.0
  %283 = vmatpush1.msra.mxu0 0.0
  %284 = vmatprep.subr.mxu0 0.0
  %285 = vmatpush1.msra.mxu0 0.0
  %286 = vmatprep.subr.mxu0 0.0
  %287 = vmatpush1.msra.mxu0 0.0
  %288 = vmatprep.subr.mxu0 0.0
  %289 = vmatpush1.msra.mxu0 0.0
  %290 = vmatprep.subr.mxu0 0.0
  %291 = vmatpush1.msra.mxu0 0.0
  %292 = vmatprep.subr.mxu0 0.0
  %293 = vmatpush1.msra.mxu0 0.0
  %294 = vmatprep.subr.mxu0 0.0
  %295 = vmatpush1.msra.mxu0 0.0
  %296 = vmatprep.subr.mxu0 0.0
  %297 = vmatpush1.msra.mxu0 0.0
  %298 = vmatprep.subr.mxu0 0.0
  %299 = vmatpush1.msra.mxu0 0.0
  %300 = vmatprep.subr.mxu0 0.0
  %301 = vmatpush1.msra.mxu0 0.0
  %302 = vmatprep.mubr.f32.mxu0 0.0
  %303 = vmatmul.mubr.f32.gmra.mrb[0].mxu0 %v236
  %v304 = vpop.f32.mrb[0].mxu0
  %v305 = vadd.f32 0.0, %v304
  %v306 = vpop.f32.mrb[0].mxu0
  %v307 = vadd.f32 0.0, %v306
  %308 = vdwg.mxu0
  %309 = vmatprep.subr.mxu0 %v192
  %310 = vmatpush1.msra.mxu0 %v191
  %311 = vmatprep.subr.mxu0 %v30
  %312 = vmatpush1.msra.mxu0 %v29
  %313 = vmatprep.subr.mxu0 %v232
  %314 = vmatpush1.msra.mxu0 %v231
  %315 = vmatprep.subr.mxu0 0.0
  %316 = vmatpush1.msra.mxu0 0.0
  %317 = vmatprep.subr.mxu0 0.0
  %318 = vmatpush1.msra.mxu0 0.0
  %319 = vmatprep.subr.mxu0 0.0
  %320 = vmatpush1.msra.mxu0 0.0
  %321 = vmatprep.subr.mxu0 0.0
  %322 = vmatpush1.msra.mxu0 0.0
  %323 = vmatprep.subr.mxu0 0.0
  %324 = vmatpush1.msra.mxu0 0.0
  %325 = vmatprep.subr.mxu0 0.0
  %326 = vmatpush1.msra.mxu0 0.0
  %327 = vmatprep.subr.mxu0 0.0
  %328 = vmatpush1.msra.mxu0 0.0
  %329 = vmatprep.subr.mxu0 0.0
  %330 = vmatpush1.msra.mxu0 0.0
  %331 = vmatprep.subr.mxu0 0.0
  %332 = vmatpush1.msra.mxu0 0.0
  %333 = vmatprep.subr.mxu0 0.0
  %334 = vmatpush1.msra.mxu0 0.0
  %335 = vmatprep.subr.mxu0 0.0
  %336 = vmatpush1.msra.mxu0 0.0
  %337 = vmatprep.subr.mxu0 0.0
  %338 = vmatpush1.msra.mxu0 0.0
  %339 = vmatprep.subr.mxu0 0.0
  %340 = vmatpush1.msra.mxu0 0.0
  %341 = vmatprep.subr.mxu0 0.0
  %342 = vmatpush1.msra.mxu0 0.0
  %343 = vmatprep.subr.mxu0 0.0
  %344 = vmatpush1.msra.mxu0 0.0
  %345 = vmatprep.subr.mxu0 0.0
  %346 = vmatpush1.msra.mxu0 0.0
  %347 = vmatprep.subr.mxu0 0.0
  %348 = vmatpush1.msra.mxu0 0.0
  %349 = vmatprep.subr.mxu0 0.0
  %350 = vmatpush1.msra.mxu0 0.0
  %351 = vmatprep.subr.mxu0 0.0
  %352 = vmatpush1.msra.mxu0 0.0
  %353 = vmatprep.subr.mxu0 0.0
  %354 = vmatpush1.msra.mxu0 0.0
  %355 = vmatprep.subr.mxu0 0.0
  %356 = vmatpush1.msra.mxu0 0.0
  %357 = vmatprep.subr.mxu0 0.0
  %358 = vmatpush1.msra.mxu0 0.0
  %359 = vmatprep.subr.mxu0 0.0
  %360 = vmatpush1.msra.mxu0 0.0
  %361 = vmatprep.subr.mxu0 0.0
  %362 = vmatpush1.msra.mxu0 0.0
  %363 = vmatprep.subr.mxu0 0.0
  %364 = vmatpush1.msra.mxu0 0.0
  %365 = vmatprep.subr.mxu0 0.0
  %366 = vmatpush1.msra.mxu0 0.0
  %367 = vmatprep.subr.mxu0 0.0
  %368 = vmatpush1.msra.mxu0 0.0
  %369 = vmatprep.subr.mxu0 0.0
  %370 = vmatpush1.msra.mxu0 0.0
  %371 = vmatprep.subr.mxu0 0.0
  %372 = vmatpush1.msra.mxu0 0.0
  %373 = vmatprep.mubr.f32.mxu0 0.0
  %374 = vmatmul.mubr.f32.gmra.mrb[0].mxu0 %v236
  %v375 = vpop.f32.mrb[0].mxu0
  %v376 = vadd.f32 0.0, %v375
  %v377 = vpop.f32.mrb[0].mxu0
  %v378 = vadd.f32 0.0, %v377
  %379 = vdwg.mxu0
  %v381 = vsel %vm234, %v152, 0
  %383 = vmatprep.subr.mxu0 %v69
  %384 = vmatpush1.msra.mxu0 %v68
  %385 = vmatprep.subr.mxu0 %v109
  %386 = vmatpush1.msra.mxu0 %v108
  %387 = vmatprep.subr.mxu0 %v149
  %388 = vmatpush1.msra.mxu0 %v148
  %389 = vmatprep.subr.mxu0 0.0
  %390 = vmatpush1.msra.mxu0 0.0
  %391 = vmatprep.subr.mxu0 0.0
  %392 = vmatpush1.msra.mxu0 0.0
  %393 = vmatprep.subr.mxu0 0.0
  %394 = vmatpush1.msra.mxu0 0.0
  %395 = vmatprep.subr.mxu0 0.0
  %396 = vmatpush1.msra.mxu0 0.0
  %397 = vmatprep.subr.mxu0 0.0
  %398 = vmatpush1.msra.mxu0 0.0
  %399 = vmatprep.subr.mxu0 0.0
  %400 = vmatpush1.msra.mxu0 0.0
  %401 = vmatprep.subr.mxu0 0.0
  %402 = vmatpush1.msra.mxu0 0.0
  %403 = vmatprep.subr.mxu0 0.0
  %404 = vmatpush1.msra.mxu0 0.0
  %405 = vmatprep.subr.mxu0 0.0
  %406 = vmatpush1.msra.mxu0 0.0
  %407 = vmatprep.subr.mxu0 0.0
  %408 = vmatpush1.msra.mxu0 0.0
  %409 = vmatprep.subr.mxu0 0.0
  %410 = vmatpush1.msra.mxu0 0.0
  %411 = vmatprep.subr.mxu0 0.0
  %412 = vmatpush1.msra.mxu0 0.0
  %413 = vmatprep.subr.mxu0 0.0
  %414 = vmatpush1.msra.mxu0 0.0
  %415 = vmatprep.subr.mxu0 0.0
  %416 = vmatpush1.msra.mxu0 0.0
  %417 = vmatprep.subr.mxu0 0.0
  %418 = vmatpush1.msra.mxu0 0.0
  %419 = vmatprep.subr.mxu0 0.0
  %420 = vmatpush1.msra.mxu0 0.0
  %421 = vmatprep.subr.mxu0 0.0
  %422 = vmatpush1.msra.mxu0 0.0
  %423 = vmatprep.subr.mxu0 0.0
  %424 = vmatpush1.msra.mxu0 0.0
  %425 = vmatprep.subr.mxu0 0.0
  %426 = vmatpush1.msra.mxu0 0.0
  %427 = vmatprep.subr.mxu0 0.0
  %428 = vmatpush1.msra.mxu0 0.0
  %429 = vmatprep.subr.mxu0 0.0
  %430 = vmatpush1.msra.mxu0 0.0
  %431 = vmatprep.subr.mxu0 0.0
  %432 = vmatpush1.msra.mxu0 0.0
  %433 = vmatprep.subr.mxu0 0.0
  %434 = vmatpush1.msra.mxu0 0.0
  %435 = vmatprep.subr.mxu0 0.0
  %436 = vmatpush1.msra.mxu0 0.0
  %437 = vmatprep.subr.mxu0 0.0
  %438 = vmatpush1.msra.mxu0 0.0
  %439 = vmatprep.subr.mxu0 0.0
  %440 = vmatpush1.msra.mxu0 0.0
  %441 = vmatprep.subr.mxu0 0.0
  %442 = vmatpush1.msra.mxu0 0.0
  %443 = vmatprep.subr.mxu0 0.0
  %444 = vmatpush1.msra.mxu0 0.0
  %445 = vmatprep.subr.mxu0 0.0
  %446 = vmatpush1.msra.mxu0 0.0
  %447 = vmatprep.mubr.f32.mxu0 0.0
  %448 = vmatmul.mubr.f32.gmra.mrb[0].mxu0 %v381
  %v449 = vpop.f32.mrb[0].mxu0
  %v450 = vadd.f32 %v305, %v449
  %v451 = vpop.f32.mrb[0].mxu0
  %v452 = vadd.f32 %v307, %v451
  %453 = vdwg.mxu0
  %454 = vmatprep.subr.mxu0 %v71
  %455 = vmatpush1.msra.mxu0 %v70
  %456 = vmatprep.subr.mxu0 %v111
  %457 = vmatpush1.msra.mxu0 %v110
  %458 = vmatprep.subr.mxu0 %v151
  %459 = vmatpush1.msra.mxu0 %v150
  %460 = vmatprep.subr.mxu0 0.0
  %461 = vmatpush1.msra.mxu0 0.0
  %462 = vmatprep.subr.mxu0 0.0
  %463 = vmatpush1.msra.mxu0 0.0
  %464 = vmatprep.subr.mxu0 0.0
  %465 = vmatpush1.msra.mxu0 0.0
  %466 = vmatprep.subr.mxu0 0.0
  %467 = vmatpush1.msra.mxu0 0.0
  %468 = vmatprep.subr.mxu0 0.0
  %469 = vmatpush1.msra.mxu0 0.0
  %470 = vmatprep.subr.mxu0 0.0
  %471 = vmatpush1.msra.mxu0 0.0
  %472 = vmatprep.subr.mxu0 0.0
  %473 = vmatpush1.msra.mxu0 0.0
  %474 = vmatprep.subr.mxu0 0.0
  %475 = vmatpush1.msra.mxu0 0.0
  %476 = vmatprep.subr.mxu0 0.0
  %477 = vmatpush1.msra.mxu0 0.0
  %478 = vmatprep.subr.mxu0 0.0
  %479 = vmatpush1.msra.mxu0 0.0
  %480 = vmatprep.subr.mxu0 0.0
  %481 = vmatpush1.msra.mxu0 0.0
  %482 = vmatprep.subr.mxu0 0.0
  %483 = vmatpush1.msra.mxu0 0.0
  %484 = vmatprep.subr.mxu0 0.0
  %485 = vmatpush1.msra.mxu0 0.0
  %486 = vmatprep.subr.mxu0 0.0
  %487 = vmatpush1.msra.mxu0 0.0
  %488 = vmatprep.subr.mxu0 0.0
  %489 = vmatpush1.msra.mxu0 0.0
  %490 = vmatprep.subr.mxu0 0.0
  %491 = vmatpush1.msra.mxu0 0.0
  %492 = vmatprep.subr.mxu0 0.0
  %493 = vmatpush1.msra.mxu0 0.0
  %494 = vmatprep.subr.mxu0 0.0
  %495 = vmatpush1.msra.mxu0 0.0
  %496 = vmatprep.subr.mxu0 0.0
  %497 = vmatpush1.msra.mxu0 0.0
  %498 = vmatprep.subr.mxu0 0.0
  %499 = vmatpush1.msra.mxu0 0.0
  %500 = vmatprep.subr.mxu0 0.0
  %501 = vmatpush1.msra.mxu0 0.0
  %502 = vmatprep.subr.mxu0 0.0
  %503 = vmatpush1.msra.mxu0 0.0
  %504 = vmatprep.subr.mxu0 0.0
  %505 = vmatpush1.msra.mxu0 0.0
  %506 = vmatprep.subr.mxu0 0.0
  %507 = vmatpush1.msra.mxu0 0.0
  %508 = vmatprep.subr.mxu0 0.0
  %509 = vmatpush1.msra.mxu0 0.0
  %510 = vmatprep.subr.mxu0 0.0
  %511 = vmatpush1.msra.mxu0 0.0
  %512 = vmatprep.subr.mxu0 0.0
  %513 = vmatpush1.msra.mxu0 0.0
  %514 = vmatprep.subr.mxu0 0.0
  %515 = vmatpush1.msra.mxu0 0.0
  %516 = vmatprep.subr.mxu0 0.0
  %517 = vmatpush1.msra.mxu0 0.0
  %518 = vmatprep.mubr.f32.mxu0 0.0
  %519 = vmatmul.mubr.f32.gmra.mrb[0].mxu0 %v381
  %v520 = vpop.f32.mrb[0].mxu0
  %v521 = vadd.f32 %v376, %v520
  %v522 = vpop.f32.mrb[0].mxu0
  %v523 = vadd.f32 %v378, %v522
  %524 = vdwg.mxu0
  %525 = vrot.lane.b32.xlu0 %v27, 113
  %v526 = vpop.permute.xlu0 %525
  %527 = vrot.lane.b32.xlu0 %v28, 113
  %v528 = vpop.permute.xlu0 %527
  %529 = vrot.lane.b32.xlu0 %v29, 113
  %v530 = vpop.permute.xlu0 %529
  %531 = vrot.lane.b32.xlu0 %v30, 113
  %v532 = vpop.permute.xlu0 %531
  %vm533 = vcmp.lt.s32.totalorder %v40, 113
  %v534 = vsel %vm533, %v530, %v532
  %v535 = vsel %vm533, %v528, %v530
  %v536 = vsel %vm533, %v526, %v528
  %v537 = vsel %vm533, %v532, %v526
  %s538 = scalar_lea.vmem %s3, 5
  %v539 = vld [vmem:[%s538] ss:$8 sm:$0xf]
  %v541 = vlaneseq
  %v542 = vshrl.u32 %v541, 7
  %v543 = vsub.s32 0, %v542
  %v544 = vrot.slane %v539, %v543
  %v545 = vlaneseq
  %v546 = vshrl.u32 %v545, 7
  %v547 = vsub.s32 1, %v546
  %v548 = vrot.slane %v539, %v547
  %v549 = vlaneseq
  %v550 = vshrl.u32 %v549, 7
  %v551 = vsub.s32 2, %v550
  %v552 = vrot.slane %v539, %v551
  %v553 = vlaneseq
  %v554 = vshrl.u32 %v553, 7
  %v555 = vsub.s32 3, %v554
  %v556 = vrot.slane %v539, %v555
  %v561 = vmul.f32 %v536, %v544
  %v562 = vmul.f32 %v535, %v548
  %v563 = vmul.f32 %v534, %v552
  %v564 = vmul.f32 %v537, %v556
  %565 = vrot.lane.b32.xlu0 %v27, 112
  %v566 = vpop.permute.xlu0 %565
  %567 = vrot.lane.b32.xlu0 %v28, 112
  %v568 = vpop.permute.xlu0 %567
  %569 = vrot.lane.b32.xlu0 %v29, 112
  %v570 = vpop.permute.xlu0 %569
  %571 = vrot.lane.b32.xlu0 %v30, 112
  %v572 = vpop.permute.xlu0 %571
  %vm573 = vcmp.lt.s32.totalorder %v40, 112
  %v574 = vsel %vm573, %v570, %v572
  %v575 = vsel %vm573, %v568, %v570
  %v576 = vsel %vm573, %v566, %v568
  %v577 = vsel %vm573, %v572, %v566
  %s578 = scalar_lea.vmem %s3, 6
  %v579 = vld [vmem:[%s578] ss:$8 sm:$0xf]
  %v581 = vlaneseq
  %v582 = vshrl.u32 %v581, 7
  %v583 = vsub.s32 0, %v582
  %v584 = vrot.slane %v579, %v583
  %v585 = vlaneseq
  %v586 = vshrl.u32 %v585, 7
  %v587 = vsub.s32 1, %v586
  %v588 = vrot.slane %v579, %v587
  %v589 = vlaneseq
  %v590 = vshrl.u32 %v589, 7
  %v591 = vsub.s32 2, %v590
  %v592 = vrot.slane %v579, %v591
  %v593 = vlaneseq
  %v594 = vshrl.u32 %v593, 7
  %v595 = vsub.s32 3, %v594
  %v596 = vrot.slane %v579, %v595
  %v601 = vmul.f32 %v576, %v584
  %v602 = vmul.f32 %v575, %v588
  %v603 = vmul.f32 %v574, %v592
  %v604 = vmul.f32 %v577, %v596
  %605 = vrot.lane.b32.xlu0 %v27, 111
  %v606 = vpop.permute.xlu0 %605
  %607 = vrot.lane.b32.xlu0 %v28, 111
  %v608 = vpop.permute.xlu0 %607
  %609 = vrot.lane.b32.xlu0 %v29, 111
  %v610 = vpop.permute.xlu0 %609
  %611 = vrot.lane.b32.xlu0 %v30, 111
  %v612 = vpop.permute.xlu0 %611
  %vm613 = vcmp.lt.s32.totalorder %v40, 111
  %v614 = vsel %vm613, %v610, %v612
  %v615 = vsel %vm613, %v608, %v610
  %v616 = vsel %vm613, %v606, %v608
  %v617 = vsel %vm613, %v612, %v606
  %s618 = scalar_lea.vmem %s3, 7
  %v619 = vld [vmem:[%s618] ss:$8 sm:$0xf]
  %v621 = vlaneseq
  %v622 = vshrl.u32 %v621, 7
  %v623 = vsub.s32 0, %v622
  %v624 = vrot.slane %v619, %v623
  %v625 = vlaneseq
  %v626 = vshrl.u32 %v625, 7
  %v627 = vsub.s32 1, %v626
  %v628 = vrot.slane %v619, %v627
  %v629 = vlaneseq
  %v630 = vshrl.u32 %v629, 7
  %v631 = vsub.s32 2, %v630
  %v632 = vrot.slane %v619, %v631
  %v633 = vlaneseq
  %v634 = vshrl.u32 %v633, 7
  %v635 = vsub.s32 3, %v634
  %v636 = vrot.slane %v619, %v635
  %v641 = vmul.f32 %v616, %v624
  %v642 = vmul.f32 %v615, %v628
  %v643 = vmul.f32 %v614, %v632
  %v644 = vmul.f32 %v617, %v636
  %v645 = vld [vmem:[%s1 + $0x10] sm:$0xff]
  %v647 = vsel %vm234, %v645, 0
  %649 = vmatprep.subr.mxu0 %v562
  %650 = vmatpush1.msra.mxu0 %v561
  %651 = vmatprep.subr.mxu0 %v602
  %652 = vmatpush1.msra.mxu0 %v601
  %653 = vmatprep.subr.mxu0 %v642
  %654 = vmatpush1.msra.mxu0 %v641
  %655 = vmatprep.subr.mxu0 0.0
  %656 = vmatpush1.msra.mxu0 0.0
  %657 = vmatprep.subr.mxu0 0.0
  %658 = vmatpush1.msra.mxu0 0.0
  %659 = vmatprep.subr.mxu0 0.0
  %660 = vmatpush1.msra.mxu0 0.0
  %661 = vmatprep.subr.mxu0 0.0
  %662 = vmatpush1.msra.mxu0 0.0
  %663 = vmatprep.subr.mxu0 0.0
  %664 = vmatpush1.msra.mxu0 0.0
  %665 = vmatprep.subr.mxu0 0.0
  %666 = vmatpush1.msra.mxu0 0.0
  %667 = vmatprep.subr.mxu0 0.0
  %668 = vmatpush1.msra.mxu0 0.0
  %669 = vmatprep.subr.mxu0 0.0
  %670 = vmatpush1.msra.mxu0 0.0
  %671 = vmatprep.subr.mxu0 0.0
  %672 = vmatpush1.msra.mxu0 0.0
  %673 = vmatprep.subr.mxu0 0.0
  %674 = vmatpush1.msra.mxu0 0.0
  %675 = vmatprep.subr.mxu0 0.0
  %676 = vmatpush1.msra.mxu0 0.0
  %677 = vmatprep.subr.mxu0 0.0
  %678 = vmatpush1.msra.mxu0 0.0
  %679 = vmatprep.subr.mxu0 0.0
  %680 = vmatpush1.msra.mxu0 0.0
  %681 = vmatprep.subr.mxu0 0.0
  %682 = vmatpush1.msra.mxu0 0.0
  %683 = vmatprep.subr.mxu0 0.0
  %684 = vmatpush1.msra.mxu0 0.0
  %685 = vmatprep.subr.mxu0 0.0
  %686 = vmatpush1.msra.mxu0 0.0
  %687 = vmatprep.subr.mxu0 0.0
  %688 = vmatpush1.msra.mxu0 0.0
  %689 = vmatprep.subr.mxu0 0.0
  %690 = vmatpush1.msra.mxu0 0.0
  %691 = vmatprep.subr.mxu0 0.0
  %692 = vmatpush1.msra.mxu0 0.0
  %693 = vmatprep.subr.mxu0 0.0
  %694 = vmatpush1.msra.mxu0 0.0
  %695 = vmatprep.subr.mxu0 0.0
  %696 = vmatpush1.msra.mxu0 0.0
  %697 = vmatprep.subr.mxu0 0.0
  %698 = vmatpush1.msra.mxu0 0.0
  %699 = vmatprep.subr.mxu0 0.0
  %700 = vmatpush1.msra.mxu0 0.0
  %701 = vmatprep.subr.mxu0 0.0
  %702 = vmatpush1.msra.mxu0 0.0
  %703 = vmatprep.subr.mxu0 0.0
  %704 = vmatpush1.msra.mxu0 0.0
  %705 = vmatprep.subr.mxu0 0.0
  %706 = vmatpush1.msra.mxu0 0.0
  %707 = vmatprep.subr.mxu0 0.0
  %708 = vmatpush1.msra.mxu0 0.0
  %709 = vmatprep.subr.mxu0 0.0
  %710 = vmatpush1.msra.mxu0 0.0
  %711 = vmatprep.subr.mxu0 0.0
  %712 = vmatpush1.msra.mxu0 0.0
  %713 = vmatprep.mubr.f32.mxu0 0.0
  %714 = vmatmul.mubr.f32.gmra.mrb[0].mxu0 %v647
  %v715 = vpop.f32.mrb[0].mxu0
  %v716 = vadd.f32 0.0, %v715
  %v717 = vpop.f32.mrb[0].mxu0
  %v718 = vadd.f32 0.0, %v717
  %719 = vdwg.mxu0
  %720 = vmatprep.subr.mxu0 %v564
  %721 = vmatpush1.msra.mxu0 %v563
  %722 = vmatprep.subr.mxu0 %v604
  %723 = vmatpush1.msra.mxu0 %v603
  %724 = vmatprep.subr.mxu0 %v644
  %725 = vmatpush1.msra.mxu0 %v643
  %726 = vmatprep.subr.mxu0 0.0
  %727 = vmatpush1.msra.mxu0 0.0
  %728 = vmatprep.subr.mxu0 0.0
  %729 = vmatpush1.msra.mxu0 0.0
  %730 = vmatprep.subr.mxu0 0.0
  %731 = vmatpush1.msra.mxu0 0.0
  %732 = vmatprep.subr.mxu0 0.0
  %733 = vmatpush1.msra.mxu0 0.0
  %734 = vmatprep.subr.mxu0 0.0
  %735 = vmatpush1.msra.mxu0 0.0
  %736 = vmatprep.subr.mxu0 0.0
  %737 = vmatpush1.msra.mxu0 0.0
  %738 = vmatprep.subr.mxu0 0.0
  %739 = vmatpush1.msra.mxu0 0.0
  %740 = vmatprep.subr.mxu0 0.0
  %741 = vmatpush1.msra.mxu0 0.0
  %742 = vmatprep.subr.mxu0 0.0
  %743 = vmatpush1.msra.mxu0 0.0
  %744 = vmatprep.subr.mxu0 0.0
  %745 = vmatpush1.msra.mxu0 0.0
  %746 = vmatprep.subr.mxu0 0.0
  %747 = vmatpush1.msra.mxu0 0.0
  %748 = vmatprep.subr.mxu0 0.0
  %749 = vmatpush1.msra.mxu0 0.0
  %750 = vmatprep.subr.mxu0 0.0
  %751 = vmatpush1.msra.mxu0 0.0
  %752 = vmatprep.subr.mxu0 0.0
  %753 = vmatpush1.msra.mxu0 0.0
  %754 = vmatprep.subr.mxu0 0.0
  %755 = vmatpush1.msra.mxu0 0.0
  %756 = vmatprep.subr.mxu0 0.0
  %757 = vmatpush1.msra.mxu0 0.0
  %758 = vmatprep.subr.mxu0 0.0
  %759 = vmatpush1.msra.mxu0 0.0
  %760 = vmatprep.subr.mxu0 0.0
  %761 = vmatpush1.msra.mxu0 0.0
  %762 = vmatprep.subr.mxu0 0.0
  %763 = vmatpush1.msra.mxu0 0.0
  %764 = vmatprep.subr.mxu0 0.0
  %765 = vmatpush1.msra.mxu0 0.0
  %766 = vmatprep.subr.mxu0 0.0
  %767 = vmatpush1.msra.mxu0 0.0
  %768 = vmatprep.subr.mxu0 0.0
  %769 = vmatpush1.msra.mxu0 0.0
  %770 = vmatprep.subr.mxu0 0.0
  %771 = vmatpush1.msra.mxu0 0.0
  %772 = vmatprep.subr.mxu0 0.0
  %773 = vmatpush1.msra.mxu0 0.0
  %774 = vmatprep.subr.mxu0 0.0
  %775 = vmatpush1.msra.mxu0 0.0
  %776 = vmatprep.subr.mxu0 0.0
  %777 = vmatpush1.msra.mxu0 0.0
  %778 = vmatprep.subr.mxu0 0.0
  %779 = vmatpush1.msra.mxu0 0.0
  %780 = vmatprep.subr.mxu0 0.0
  %781 = vmatpush1.msra.mxu0 0.0
  %782 = vmatprep.subr.mxu0 0.0
  %783 = vmatpush1.msra.mxu0 0.0
  %784 = vmatprep.mubr.f32.mxu0 0.0
  %785 = vmatmul.mubr.f32.gmra.mrb[0].mxu0 %v647
  %v786 = vpop.f32.mrb[0].mxu0
  %v787 = vadd.f32 0.0, %v786
  %v788 = vpop.f32.mrb[0].mxu0
  %v789 = vadd.f32 0.0, %v788
  %790 = vdwg.mxu0
  %v791 = vadd.f32 %v450, %v716
  %v792 = vadd.f32 %v452, %v718
  %v793 = vadd.f32 %v521, %v787
  %v794 = vadd.f32 %v523, %v789
  %795 = vmatprep.subr.mxu0 0.0
  %796 = vmatpush1.msra.mxu0 1.0
  %797 = vmatprep.subr.mxu0 0.0
  %798 = vmatpush1.msra.mxu0 1.0
  %799 = vmatprep.subr.mxu0 0.0
  %800 = vmatpush1.msra.mxu0 1.0
  %801 = vmatprep.subr.mxu0 0.0
  %802 = vmatpush1.msra.mxu0 1.0
  %803 = vmatprep.subr.mxu0 0.0
  %804 = vmatpush1.msra.mxu0 1.0
  %805 = vmatprep.subr.mxu0 0.0
  %806 = vmatpush1.msra.mxu0 1.0
  %807 = vmatprep.subr.mxu0 0.0
  %808 = vmatpush1.msra.mxu0 1.0
  %809 = vmatprep.subr.mxu0 0.0
  %810 = vmatpush1.msra.mxu0 1.0
  %811 = vmatprep.subr.mxu0 0.0
  %812 = vmatpush1.msra.mxu0 1.0
  %813 = vmatprep.subr.mxu0 0.0
  %814 = vmatpush1.msra.mxu0 1.0
  %815 = vmatprep.subr.mxu0 0.0
  %816 = vmatpush1.msra.mxu0 1.0
  %817 = vmatprep.subr.mxu0 0.0
  %818 = vmatpush1.msra.mxu0 1.0
  %819 = vmatprep.subr.mxu0 0.0
  %820 = vmatpush1.msra.mxu0 1.0
  %821 = vmatprep.subr.mxu0 0.0
  %822 = vmatpush1.msra.mxu0 1.0
  %823 = vmatprep.subr.mxu0 0.0
  %824 = vmatpush1.msra.mxu0 1.0
  %825 = vmatprep.subr.mxu0 0.0
  %826 = vmatpush1.msra.mxu0 1.0
  %827 = vmatprep.subr.mxu0 0.0
  %828 = vmatpush1.msra.mxu0 1.0
  %829 = vmatprep.subr.mxu0 0.0
  %830 = vmatpush1.msra.mxu0 1.0
  %831 = vmatprep.subr.mxu0 0.0
  %832 = vmatpush1.msra.mxu0 1.0
  %833 = vmatprep.subr.mxu0 0.0
  %834 = vmatpush1.msra.mxu0 1.0
  %835 = vmatprep.subr.mxu0 0.0
  %836 = vmatpush1.msra.mxu0 1.0
  %837 = vmatprep.subr.mxu0 0.0
  %838 = vmatpush1.msra.mxu0 1.0
  %839 = vmatprep.subr.mxu0 0.0
  %840 = vmatpush1.msra.mxu0 1.0
  %841 = vmatprep.subr.mxu0 0.0
  %842 = vmatpush1.msra.mxu0 1.0
  %843 = vmatprep.subr.mxu0 0.0
  %844 = vmatpush1.msra.mxu0 1.0
  %845 = vmatprep.subr.mxu0 0.0
  %846 = vmatpush1.msra.mxu0 1.0
  %847 = vmatprep.subr.mxu0 0.0
  %848 = vmatpush1.msra.mxu0 1.0
  %849 = vmatprep.subr.mxu0 0.0
  %850 = vmatpush1.msra.mxu0 1.0
  %851 = vmatprep.subr.mxu0 0.0
  %852 = vmatpush1.msra.mxu0 1.0
  %853 = vmatprep.subr.mxu0 0.0
  %854 = vmatpush1.msra.mxu0 1.0
  %855 = vmatprep.subr.mxu0 0.0
  %856 = vmatpush1.msra.mxu0 1.0
  %857 = vmatprep.subr.mxu0 0.0
  %858 = vmatpush1.msra.mxu0 1.0
  %859 = vmatprep.mubr.f32.mxu0 %v792
  %860 = vmatmul.mubr.f32.gmra.mrb[0].mxu0 %v791
  %v861 = vpop.f32.mrb[0].mxu0
  %v862 = vadd.f32 0.0, %v861
  %v863 = vpop.f32.mrb[0].mxu0
  %864 = vdwg.mxu0
  %865 = vmatprep.subr.mxu0 0.0
  %866 = vmatpush1.msra.mxu0 1.0
  %867 = vmatprep.subr.mxu0 0.0
  %868 = vmatpush1.msra.mxu0 1.0
  %869 = vmatprep.subr.mxu0 0.0
  %870 = vmatpush1.msra.mxu0 1.0
  %871 = vmatprep.subr.mxu0 0.0
  %872 = vmatpush1.msra.mxu0 1.0
  %873 = vmatprep.subr.mxu0 0.0
  %874 = vmatpush1.msra.mxu0 1.0
  %875 = vmatprep.subr.mxu0 0.0
  %876 = vmatpush1.msra.mxu0 1.0
  %877 = vmatprep.subr.mxu0 0.0
  %878 = vmatpush1.msra.mxu0 1.0
  %879 = vmatprep.subr.mxu0 0.0
  %880 = vmatpush1.msra.mxu0 1.0
  %881 = vmatprep.subr.mxu0 0.0
  %882 = vmatpush1.msra.mxu0 1.0
  %883 = vmatprep.subr.mxu0 0.0
  %884 = vmatpush1.msra.mxu0 1.0
  %885 = vmatprep.subr.mxu0 0.0
  %886 = vmatpush1.msra.mxu0 1.0
  %887 = vmatprep.subr.mxu0 0.0
  %888 = vmatpush1.msra.mxu0 1.0
  %889 = vmatprep.subr.mxu0 0.0
  %890 = vmatpush1.msra.mxu0 1.0
  %891 = vmatprep.subr.mxu0 0.0
  %892 = vmatpush1.msra.mxu0 1.0
  %893 = vmatprep.subr.mxu0 0.0
  %894 = vmatpush1.msra.mxu0 1.0
  %895 = vmatprep.subr.mxu0 0.0
  %896 = vmatpush1.msra.mxu0 1.0
  %897 = vmatprep.subr.mxu0 0.0
  %898 = vmatpush1.msra.mxu0 1.0
  %899 = vmatprep.subr.mxu0 0.0
  %900 = vmatpush1.msra.mxu0 1.0
  %901 = vmatprep.subr.mxu0 0.0
  %902 = vmatpush1.msra.mxu0 1.0
  %903 = vmatprep.subr.mxu0 0.0
  %904 = vmatpush1.msra.mxu0 1.0
  %905 = vmatprep.subr.mxu0 0.0
  %906 = vmatpush1.msra.mxu0 1.0
  %907 = vmatprep.subr.mxu0 0.0
  %908 = vmatpush1.msra.mxu0 1.0
  %909 = vmatprep.subr.mxu0 0.0
  %910 = vmatpush1.msra.mxu0 1.0
  %911 = vmatprep.subr.mxu0 0.0
  %912 = vmatpush1.msra.mxu0 1.0
  %913 = vmatprep.subr.mxu0 0.0
  %914 = vmatpush1.msra.mxu0 1.0
  %915 = vmatprep.subr.mxu0 0.0
  %916 = vmatpush1.msra.mxu0 1.0
  %917 = vmatprep.subr.mxu0 0.0
  %918 = vmatpush1.msra.mxu0 1.0
  %919 = vmatprep.subr.mxu0 0.0
  %920 = vmatpush1.msra.mxu0 1.0
  %921 = vmatprep.subr.mxu0 0.0
  %922 = vmatpush1.msra.mxu0 1.0
  %923 = vmatprep.subr.mxu0 0.0
  %924 = vmatpush1.msra.mxu0 1.0
  %925 = vmatprep.subr.mxu0 0.0
  %926 = vmatpush1.msra.mxu0 1.0
  %927 = vmatprep.subr.mxu0 0.0
  %928 = vmatpush1.msra.mxu0 1.0
  %929 = vmatprep.mubr.f32.mxu0 %v794
  %930 = vmatmul.mubr.f32.gmra.mrb[0].mxu0 %v793
  %v931 = vpop.f32.mrb[0].mxu0
  %v932 = vadd.f32 %v862, %v931
  %v933 = vpop.f32.mrb[0].mxu0
  %934 = vdwg.mxu0
  %v935 = vmul.f32 %v791, %v791
  %v936 = vmul.f32 %v792, %v792
  %v937 = vmul.f32 %v793, %v793
  %v938 = vmul.f32 %v794, %v794
  %939 = vmatprep.subr.mxu0 0.0
  %940 = vmatpush1.msra.mxu0 1.0
  %941 = vmatprep.subr.mxu0 0.0
  %942 = vmatpush1.msra.mxu0 1.0
  %943 = vmatprep.subr.mxu0 0.0
  %944 = vmatpush1.msra.mxu0 1.0
  %945 = vmatprep.subr.mxu0 0.0
  %946 = vmatpush1.msra.mxu0 1.0
  %947 = vmatprep.subr.mxu0 0.0
  %948 = vmatpush1.msra.mxu0 1.0
  %949 = vmatprep.subr.mxu0 0.0
  %950 = vmatpush1.msra.mxu0 1.0
  %951 = vmatprep.subr.mxu0 0.0
  %952 = vmatpush1.msra.mxu0 1.0
  %953 = vmatprep.subr.mxu0 0.0
  %954 = vmatpush1.msra.mxu0 1.0
  %955 = vmatprep.subr.mxu0 0.0
  %956 = vmatpush1.msra.mxu0 1.0
  %957 = vmatprep.subr.mxu0 0.0
  %958 = vmatpush1.msra.mxu0 1.0
  %959 = vmatprep.subr.mxu0 0.0
  %960 = vmatpush1.msra.mxu0 1.0
  %961 = vmatprep.subr.mxu0 0.0
  %962 = vmatpush1.msra.mxu0 1.0
  %963 = vmatprep.subr.mxu0 0.0
  %964 = vmatpush1.msra.mxu0 1.0
  %965 = vmatprep.subr.mxu0 0.0
  %966 = vmatpush1.msra.mxu0 1.0
  %967 = vmatprep.subr.mxu0 0.0
  %968 = vmatpush1.msra.mxu0 1.0
  %969 = vmatprep.subr.mxu0 0.0
  %970 = vmatpush1.msra.mxu0 1.0
  %971 = vmatprep.subr.mxu0 0.0
  %972 = vmatpush1.msra.mxu0 1.0
  %973 = vmatprep.subr.mxu0 0.0
  %974 = vmatpush1.msra.mxu0 1.0
  %975 = vmatprep.subr.mxu0 0.0
  %976 = vmatpush1.msra.mxu0 1.0
  %977 = vmatprep.subr.mxu0 0.0
  %978 = vmatpush1.msra.mxu0 1.0
  %979 = vmatprep.subr.mxu0 0.0
  %980 = vmatpush1.msra.mxu0 1.0
  %981 = vmatprep.subr.mxu0 0.0
  %982 = vmatpush1.msra.mxu0 1.0
  %983 = vmatprep.subr.mxu0 0.0
  %984 = vmatpush1.msra.mxu0 1.0
  %985 = vmatprep.subr.mxu0 0.0
  %986 = vmatpush1.msra.mxu0 1.0
  %987 = vmatprep.subr.mxu0 0.0
  %988 = vmatpush1.msra.mxu0 1.0
  %989 = vmatprep.subr.mxu0 0.0
  %990 = vmatpush1.msra.mxu0 1.0
  %991 = vmatprep.subr.mxu0 0.0
  %992 = vmatpush1.msra.mxu0 1.0
  %993 = vmatprep.subr.mxu0 0.0
  %994 = vmatpush1.msra.mxu0 1.0
  %995 = vmatprep.subr.mxu0 0.0
  %996 = vmatpush1.msra.mxu0 1.0
  %997 = vmatprep.subr.mxu0 0.0
  %998 = vmatpush1.msra.mxu0 1.0
  %999 = vmatprep.subr.mxu0 0.0
  %1000 = vmatpush1.msra.mxu0 1.0
  %1001 = vmatprep.subr.mxu0 0.0
  %1002 = vmatpush1.msra.mxu0 1.0
  %1003 = vmatprep.mubr.f32.mxu0 %v936
  %1004 = vmatmul.mubr.f32.gmra.mrb[0].mxu0 %v935
  %v1005 = vpop.f32.mrb[0].mxu0
  %v1006 = vadd.f32 0.0, %v1005
  %v1007 = vpop.f32.mrb[0].mxu0
  %1008 = vdwg.mxu0
  %1009 = vmatprep.subr.mxu0 0.0
  %1010 = vmatpush1.msra.mxu0 1.0
  %1011 = vmatprep.subr.mxu0 0.0
  %1012 = vmatpush1.msra.mxu0 1.0
  %1013 = vmatprep.subr.mxu0 0.0
  %1014 = vmatpush1.msra.mxu0 1.0
  %1015 = vmatprep.subr.mxu0 0.0
  %1016 = vmatpush1.msra.mxu0 1.0
  %1017 = vmatprep.subr.mxu0 0.0
  %1018 = vmatpush1.msra.mxu0 1.0
  %1019 = vmatprep.subr.mxu0 0.0
  %1020 = vmatpush1.msra.mxu0 1.0
  %1021 = vmatprep.subr.mxu0 0.0
  %1022 = vmatpush1.msra.mxu0 1.0
  %1023 = vmatprep.subr.mxu0 0.0
  %1024 = vmatpush1.msra.mxu0 1.0
  %1025 = vmatprep.subr.mxu0 0.0
  %1026 = vmatpush1.msra.mxu0 1.0
  %1027 = vmatprep.subr.mxu0 0.0
  %1028 = vmatpush1.msra.mxu0 1.0
  %1029 = vmatprep.subr.mxu0 0.0
  %1030 = vmatpush1.msra.mxu0 1.0
  %1031 = vmatprep.subr.mxu0 0.0
  %1032 = vmatpush1.msra.mxu0 1.0
  %1033 = vmatprep.subr.mxu0 0.0
  %1034 = vmatpush1.msra.mxu0 1.0
  %1035 = vmatprep.subr.mxu0 0.0
  %1036 = vmatpush1.msra.mxu0 1.0
  %1037 = vmatprep.subr.mxu0 0.0
  %1038 = vmatpush1.msra.mxu0 1.0
  %1039 = vmatprep.subr.mxu0 0.0
  %1040 = vmatpush1.msra.mxu0 1.0
  %1041 = vmatprep.subr.mxu0 0.0
  %1042 = vmatpush1.msra.mxu0 1.0
  %1043 = vmatprep.subr.mxu0 0.0
  %1044 = vmatpush1.msra.mxu0 1.0
  %1045 = vmatprep.subr.mxu0 0.0
  %1046 = vmatpush1.msra.mxu0 1.0
  %1047 = vmatprep.subr.mxu0 0.0
  %1048 = vmatpush1.msra.mxu0 1.0
  %1049 = vmatprep.subr.mxu0 0.0
  %1050 = vmatpush1.msra.mxu0 1.0
  %1051 = vmatprep.subr.mxu0 0.0
  %1052 = vmatpush1.msra.mxu0 1.0
  %1053 = vmatprep.subr.mxu0 0.0
  %1054 = vmatpush1.msra.mxu0 1.0
  %1055 = vmatprep.subr.mxu0 0.0
  %1056 = vmatpush1.msra.mxu0 1.0
  %1057 = vmatprep.subr.mxu0 0.0
  %1058 = vmatpush1.msra.mxu0 1.0
  %1059 = vmatprep.subr.mxu0 0.0
  %1060 = vmatpush1.msra.mxu0 1.0
  %1061 = vmatprep.subr.mxu0 0.0
  %1062 = vmatpush1.msra.mxu0 1.0
  %1063 = vmatprep.subr.mxu0 0.0
  %1064 = vmatpush1.msra.mxu0 1.0
  %1065 = vmatprep.subr.mxu0 0.0
  %1066 = vmatpush1.msra.mxu0 1.0
  %1067 = vmatprep.subr.mxu0 0.0
  %1068 = vmatpush1.msra.mxu0 1.0
  %1069 = vmatprep.subr.mxu0 0.0
  %1070 = vmatpush1.msra.mxu0 1.0
  %1071 = vmatprep.subr.mxu0 0.0
  %1072 = vmatpush1.msra.mxu0 1.0
  %1073 = vmatprep.mubr.f32.mxu0 %v938
  %1074 = vmatmul.mubr.f32.gmra.mrb[0].mxu0 %v937
  %v1075 = vpop.f32.mrb[0].mxu0
  %v1076 = vadd.f32 %v1006, %v1075
  %v1077 = vpop.f32.mrb[0].mxu0
  %1078 = vdwg.mxu0
  %v1079 = vmul.f32 %v932, 0.001953125
  %v1080 = vmul.f32 %v1076, 0.001953125
  %v1081 = vmul.f32 %v1079, %v1079
  %v1082 = vsub.f32 %v1080, %v1081
  %v1083 = vadd.f32 %v1082, 1e-05
  %v1084 = vrsqrt.pop %v1083
  %v1085 = vmul.f32 %v17, %v1084
  %v1086 = vmul.f32 %v1079, %v1085
  %1088 = vrot.lane.b32.xlu0 %v1086, 1
  %v1089 = vpop.permute.xlu0 %1088
  %v1091 = vsub.f32 %v17, %v1089
  %1093 = vset.pattern.permute.xlu0 0
  %1094 = vperm.xlu0 %1093, %v1085
  %v1095 = vpop.permute.xlu0 %1094
  %v1097 = vmul.f32 %v791, %v1095
  %v1098 = vmul.f32 %v792, %v1095
  %v1099 = vmul.f32 %v793, %v1095
  %v1100 = vmul.f32 %v794, %v1095
  %1102 = vset.pattern.permute.xlu0 1
  %1103 = vperm.xlu0 %1102, %v1091
  %v1104 = vpop.permute.xlu0 %1103
  %v1106 = vadd.f32 %v1097, %v1104
  %v1107 = vadd.f32 %v1098, %v1104
  %v1108 = vadd.f32 %v1099, %v1104
  %v1109 = vadd.f32 %v1100, %v1104
  %v1110 = vmax.f32 %v1106, 0.0
  %v1111 = vmax.f32 %v1107, 0.0
  %v1112 = vmax.f32 %v1108, 0.0
  %v1113 = vmax.f32 %v1109, 0.0
  %1114 = vrot.lane.b32.xlu0 %v1110, 17
  %v1115 = vpop.permute.xlu0 %1114
  %1116 = vrot.lane.b32.xlu0 %v1111, 17
  %v1117 = vpop.permute.xlu0 %1116
  %1118 = vrot.lane.b32.xlu0 %v1112, 17
  %v1119 = vpop.permute.xlu0 %1118
  %1120 = vrot.lane.b32.xlu0 %v1113, 17
  %v1121 = vpop.permute.xlu0 %1120
  %v1122 = vsel %vm41, %v1119, %v1121
  %v1123 = vsel %vm41, %v1117, %v1119
  %v1124 = vsel %vm41, %v1115, %v1117
  %v1125 = vsel %vm41, %v1121, %v1115
  %v1126 = vmul.f32 %v1125, %v51
  %v1127 = vmul.f32 %v1124, %v55
  %v1128 = vmul.f32 %v1123, %v59
  %v1129 = vmul.f32 %v1122, %v63
  %1130 = vrot.lane.b32.xlu0 %v1110, 16
  %v1131 = vpop.permute.xlu0 %1130
  %1132 = vrot.lane.b32.xlu0 %v1111, 16
  %v1133 = vpop.permute.xlu0 %1132
  %1134 = vrot.lane.b32.xlu0 %v1112, 16
  %v1135 = vpop.permute.xlu0 %1134
  %1136 = vrot.lane.b32.xlu0 %v1113, 16
  %v1137 = vpop.permute.xlu0 %1136
  %v1138 = vsel %vm80, %v1135, %v1137
  %v1139 = vsel %vm80, %v1133, %v1135
  %v1140 = vsel %vm80, %v1131, %v1133
  %v1141 = vsel %vm80, %v1137, %v1131
  %v1142 = vmul.f32 %v1141, %v91
  %v1143 = vmul.f32 %v1140, %v95
  %v1144 = vmul.f32 %v1139, %v99
  %v1145 = vmul.f32 %v1138, %v103
  %1146 = vrot.lane.b32.xlu0 %v1110, 15
  %v1147 = vpop.permute.xlu0 %1146
  %1148 = vrot.lane.b32.xlu0 %v1111, 15
  %v1149 = vpop.permute.xlu0 %1148
  %1150 = vrot.lane.b32.xlu0 %v1112, 15
  %v1151 = vpop.permute.xlu0 %1150
  %1152 = vrot.lane.b32.xlu0 %v1113, 15
  %v1153 = vpop.permute.xlu0 %1152
  %v1154 = vsel %vm120, %v1151, %v1153
  %v1155 = vsel %vm120, %v1149, %v1151
  %v1156 = vsel %vm120, %v1147, %v1149
  %v1157 = vsel %vm120, %v1153, %v1147
  %v1158 = vmul.f32 %v1157, %v131
  %v1159 = vmul.f32 %v1156, %v135
  %v1160 = vmul.f32 %v1155, %v139
  %v1161 = vmul.f32 %v1154, %v143
  %v1162 = vld [vmem:[%s1 + $0x18] sm:$0xff]
  %1163 = vrot.lane.b32.xlu0 %v1110, 1
  %v1164 = vpop.permute.xlu0 %1163
  %1165 = vrot.lane.b32.xlu0 %v1111, 1
  %v1166 = vpop.permute.xlu0 %1165
  %1167 = vrot.lane.b32.xlu0 %v1112, 1
  %v1168 = vpop.permute.xlu0 %1167
  %1169 = vrot.lane.b32.xlu0 %v1113, 1
  %v1170 = vpop.permute.xlu0 %1169
  %v1171 = vsel %vm161, %v1168, %v1170
  %v1172 = vsel %vm161, %v1166, %v1168
  %v1173 = vsel %vm161, %v1164, %v1166
  %v1174 = vsel %vm161, %v1170, %v1164
  %v1175 = vmul.f32 %v1174, %v172
  %v1176 = vmul.f32 %v1173, %v176
  %v1177 = vmul.f32 %v1172, %v180
  %v1178 = vmul.f32 %v1171, %v184
  %1179 = vrot.lane.b32.xlu0 %v1110, 127
  %v1180 = vpop.permute.xlu0 %1179
  %1181 = vrot.lane.b32.xlu0 %v1111, 127
  %v1182 = vpop.permute.xlu0 %1181
  %1183 = vrot.lane.b32.xlu0 %v1112, 127
  %v1184 = vpop.permute.xlu0 %1183
  %1185 = vrot.lane.b32.xlu0 %v1113, 127
  %v1186 = vpop.permute.xlu0 %1185
  %v1187 = vsel %vm201, %v1184, %v1186
  %v1188 = vsel %vm201, %v1182, %v1184
  %v1189 = vsel %vm201, %v1180, %v1182
  %v1190 = vsel %vm201, %v1186, %v1180
  %v1191 = vmul.f32 %v1189, %v212
  %v1192 = vmul.f32 %v1188, %v216
  %v1193 = vmul.f32 %v1187, %v220
  %v1194 = vmul.f32 %v1190, %v224
  %v1195 = vld [vmem:[%s1 + $0x20] sm:$0xff]
  %v1197 = vsel %vm234, %v1195, 0
  %1199 = vmatprep.subr.mxu0 %v1176
  %1200 = vmatpush1.msra.mxu0 %v1175
  %1201 = vmatprep.subr.mxu0 %v1111
  %1202 = vmatpush1.msra.mxu0 %v1110
  %1203 = vmatprep.subr.mxu0 %v1192
  %1204 = vmatpush1.msra.mxu0 %v1191
  %1205 = vmatprep.subr.mxu0 0.0
  %1206 = vmatpush1.msra.mxu0 0.0
  %1207 = vmatprep.subr.mxu0 0.0
  %1208 = vmatpush1.msra.mxu0 0.0
  %1209 = vmatprep.subr.mxu0 0.0
  %1210 = vmatpush1.msra.mxu0 0.0
  %1211 = vmatprep.subr.mxu0 0.0
  %1212 = vmatpush1.msra.mxu0 0.0
  %1213 = vmatprep.subr.mxu0 0.0
  %1214 = vmatpush1.msra.mxu0 0.0
  %1215 = vmatprep.subr.mxu0 0.0
  %1216 = vmatpush1.msra.mxu0 0.0
  %1217 = vmatprep.subr.mxu0 0.0
  %1218 = vmatpush1.msra.mxu0 0.0
  %1219 = vmatprep.subr.mxu0 0.0
  %1220 = vmatpush1.msra.mxu0 0.0
  %1221 = vmatprep.subr.mxu0 0.0
  %1222 = vmatpush1.msra.mxu0 0.0
  %1223 = vmatprep.subr.mxu0 0.0
  %1224 = vmatpush1.msra.mxu0 0.0
  %1225 = vmatprep.subr.mxu0 0.0
  %1226 = vmatpush1.msra.mxu0 0.0
  %1227 = vmatprep.subr.mxu0 0.0
  %1228 = vmatpush1.msra.mxu0 0.0
  %1229 = vmatprep.subr.mxu0 0.0
  %1230 = vmatpush1.msra.mxu0 0.0
  %1231 = vmatprep.subr.mxu0 0.0
  %1232 = vmatpush1.msra.mxu0 0.0
  %1233 = vmatprep.subr.mxu0 0.0
  %1234 = vmatpush1.msra.mxu0 0.0
  %1235 = vmatprep.subr.mxu0 0.0
  %1236 = vmatpush1.msra.mxu0 0.0
  %1237 = vmatprep.subr.mxu0 0.0
  %1238 = vmatpush1.msra.mxu0 0.0
  %1239 = vmatprep.subr.mxu0 0.0
  %1240 = vmatpush1.msra.mxu0 0.0
  %1241 = vmatprep.subr.mxu0 0.0
  %1242 = vmatpush1.msra.mxu0 0.0
  %1243 = vmatprep.subr.mxu0 0.0
  %1244 = vmatpush1.msra.mxu0 0.0
  %1245 = vmatprep.subr.mxu0 0.0
  %1246 = vmatpush1.msra.mxu0 0.0
  %1247 = vmatprep.subr.mxu0 0.0
  %1248 = vmatpush1.msra.mxu0 0.0
  %1249 = vmatprep.subr.mxu0 0.0
  %1250 = vmatpush1.msra.mxu0 0.0
  %1251 = vmatprep.subr.mxu0 0.0
  %1252 = vmatpush1.msra.mxu0 0.0
  %1253 = vmatprep.subr.mxu0 0.0
  %1254 = vmatpush1.msra.mxu0 0.0
  %1255 = vmatprep.subr.mxu0 0.0
  %1256 = vmatpush1.msra.mxu0 0.0
  %1257 = vmatprep.subr.mxu0 0.0
  %1258 = vmatpush1.msra.mxu0 0.0
  %1259 = vmatprep.subr.mxu0 0.0
  %1260 = vmatpush1.msra.mxu0 0.0
  %1261 = vmatprep.subr.mxu0 0.0
  %1262 = vmatpush1.msra.mxu0 0.0
  %1263 = vmatprep.mubr.f32.mxu0 0.0
  %1264 = vmatmul.mubr.f32.gmra.mrb[0].mxu0 %v1197
  %v1265 = vpop.f32.mrb[0].mxu0
  %v1266 = vadd.f32 0.0, %v1265
  %v1267 = vpop.f32.mrb[0].mxu0
  %v1268 = vadd.f32 0.0, %v1267
  %1269 = vdwg.mxu0
  %1270 = vmatprep.subr.mxu0 %v1178
  %1271 = vmatpush1.msra.mxu0 %v1177
  %1272 = vmatprep.subr.mxu0 %v1113
  %1273 = vmatpush1.msra.mxu0 %v1112
  %1274 = vmatprep.subr.mxu0 %v1194
  %1275 = vmatpush1.msra.mxu0 %v1193
  %1276 = vmatprep.subr.mxu0 0.0
  %1277 = vmatpush1.msra.mxu0 0.0
  %1278 = vmatprep.subr.mxu0 0.0
  %1279 = vmatpush1.msra.mxu0 0.0
  %1280 = vmatprep.subr.mxu0 0.0
  %1281 = vmatpush1.msra.mxu0 0.0
  %1282 = vmatprep.subr.mxu0 0.0
  %1283 = vmatpush1.msra.mxu0 0.0
  %1284 = vmatprep.subr.mxu0 0.0
  %1285 = vmatpush1.msra.mxu0 0.0
  %1286 = vmatprep.subr.mxu0 0.0
  %1287 = vmatpush1.msra.mxu0 0.0
  %1288 = vmatprep.subr.mxu0 0.0
  %1289 = vmatpush1.msra.mxu0 0.0
  %1290 = vmatprep.subr.mxu0 0.0
  %1291 = vmatpush1.msra.mxu0 0.0
  %1292 = vmatprep.subr.mxu0 0.0
  %1293 = vmatpush1.msra.mxu0 0.0
  %1294 = vmatprep.subr.mxu0 0.0
  %1295 = vmatpush1.msra.mxu0 0.0
  %1296 = vmatprep.subr.mxu0 0.0
  %1297 = vmatpush1.msra.mxu0 0.0
  %1298 = vmatprep.subr.mxu0 0.0
  %1299 = vmatpush1.msra.mxu0 0.0
  %1300 = vmatprep.subr.mxu0 0.0
  %1301 = vmatpush1.msra.mxu0 0.0
  %1302 = vmatprep.subr.mxu0 0.0
  %1303 = vmatpush1.msra.mxu0 0.0
  %1304 = vmatprep.subr.mxu0 0.0
  %1305 = vmatpush1.msra.mxu0 0.0
  %1306 = vmatprep.subr.mxu0 0.0
  %1307 = vmatpush1.msra.mxu0 0.0
  %1308 = vmatprep.subr.mxu0 0.0
  %1309 = vmatpush1.msra.mxu0 0.0
  %1310 = vmatprep.subr.mxu0 0.0
  %1311 = vmatpush1.msra.mxu0 0.0
  %1312 = vmatprep.subr.mxu0 0.0
  %1313 = vmatpush1.msra.mxu0 0.0
  %1314 = vmatprep.subr.mxu0 0.0
  %1315 = vmatpush1.msra.mxu0 0.0
  %1316 = vmatprep.subr.mxu0 0.0
  %1317 = vmatpush1.msra.mxu0 0.0
  %1318 = vmatprep.subr.mxu0 0.0
  %1319 = vmatpush1.msra.mxu0 0.0
  %1320 = vmatprep.subr.mxu0 0.0
  %1321 = vmatpush1.msra.mxu0 0.0
  %1322 = vmatprep.subr.mxu0 0.0
  %1323 = vmatpush1.msra.mxu0 0.0
  %1324 = vmatprep.subr.mxu0 0.0
  %1325 = vmatpush1.msra.mxu0 0.0
  %1326 = vmatprep.subr.mxu0 0.0
  %1327 = vmatpush1.msra.mxu0 0.0
  %1328 = vmatprep.subr.mxu0 0.0
  %1329 = vmatpush1.msra.mxu0 0.0
  %1330 = vmatprep.subr.mxu0 0.0
  %1331 = vmatpush1.msra.mxu0 0.0
  %1332 = vmatprep.subr.mxu0 0.0
  %1333 = vmatpush1.msra.mxu0 0.0
  %1334 = vmatprep.mubr.f32.mxu0 0.0
  %1335 = vmatmul.mubr.f32.gmra.mrb[0].mxu0 %v1197
  %v1336 = vpop.f32.mrb[0].mxu0
  %v1337 = vadd.f32 0.0, %v1336
  %v1338 = vpop.f32.mrb[0].mxu0
  %v1339 = vadd.f32 0.0, %v1338
  %1340 = vdwg.mxu0
  %v1342 = vsel %vm234, %v1162, 0
  %1344 = vmatprep.subr.mxu0 %v1127
  %1345 = vmatpush1.msra.mxu0 %v1126
  %1346 = vmatprep.subr.mxu0 %v1143
  %1347 = vmatpush1.msra.mxu0 %v1142
  %1348 = vmatprep.subr.mxu0 %v1159
  %1349 = vmatpush1.msra.mxu0 %v1158
  %1350 = vmatprep.subr.mxu0 0.0
  %1351 = vmatpush1.msra.mxu0 0.0
  %1352 = vmatprep.subr.mxu0 0.0
  %1353 = vmatpush1.msra.mxu0 0.0
  %1354 = vmatprep.subr.mxu0 0.0
  %1355 = vmatpush1.msra.mxu0 0.0
  %1356 = vmatprep.subr.mxu0 0.0
  %1357 = vmatpush1.msra.mxu0 0.0
  %1358 = vmatprep.subr.mxu0 0.0
  %1359 = vmatpush1.msra.mxu0 0.0
  %1360 = vmatprep.subr.mxu0 0.0
  %1361 = vmatpush1.msra.mxu0 0.0
  %1362 = vmatprep.subr.mxu0 0.0
  %1363 = vmatpush1.msra.mxu0 0.0
  %1364 = vmatprep.subr.mxu0 0.0
  %1365 = vmatpush1.msra.mxu0 0.0
  %1366 = vmatprep.subr.mxu0 0.0
  %1367 = vmatpush1.msra.mxu0 0.0
  %1368 = vmatprep.subr.mxu0 0.0
  %1369 = vmatpush1.msra.mxu0 0.0
  %1370 = vmatprep.subr.mxu0 0.0
  %1371 = vmatpush1.msra.mxu0 0.0
  %1372 = vmatprep.subr.mxu0 0.0
  %1373 = vmatpush1.msra.mxu0 0.0
  %1374 = vmatprep.subr.mxu0 0.0
  %1375 = vmatpush1.msra.mxu0 0.0
  %1376 = vmatprep.subr.mxu0 0.0
  %1377 = vmatpush1.msra.mxu0 0.0
  %1378 = vmatprep.subr.mxu0 0.0
  %1379 = vmatpush1.msra.mxu0 0.0
  %1380 = vmatprep.subr.mxu0 0.0
  %1381 = vmatpush1.msra.mxu0 0.0
  %1382 = vmatprep.subr.mxu0 0.0
  %1383 = vmatpush1.msra.mxu0 0.0
  %1384 = vmatprep.subr.mxu0 0.0
  %1385 = vmatpush1.msra.mxu0 0.0
  %1386 = vmatprep.subr.mxu0 0.0
  %1387 = vmatpush1.msra.mxu0 0.0
  %1388 = vmatprep.subr.mxu0 0.0
  %1389 = vmatpush1.msra.mxu0 0.0
  %1390 = vmatprep.subr.mxu0 0.0
  %1391 = vmatpush1.msra.mxu0 0.0
  %1392 = vmatprep.subr.mxu0 0.0
  %1393 = vmatpush1.msra.mxu0 0.0
  %1394 = vmatprep.subr.mxu0 0.0
  %1395 = vmatpush1.msra.mxu0 0.0
  %1396 = vmatprep.subr.mxu0 0.0
  %1397 = vmatpush1.msra.mxu0 0.0
  %1398 = vmatprep.subr.mxu0 0.0
  %1399 = vmatpush1.msra.mxu0 0.0
  %1400 = vmatprep.subr.mxu0 0.0
  %1401 = vmatpush1.msra.mxu0 0.0
  %1402 = vmatprep.subr.mxu0 0.0
  %1403 = vmatpush1.msra.mxu0 0.0
  %1404 = vmatprep.subr.mxu0 0.0
  %1405 = vmatpush1.msra.mxu0 0.0
  %1406 = vmatprep.subr.mxu0 0.0
  %1407 = vmatpush1.msra.mxu0 0.0
  %1408 = vmatprep.mubr.f32.mxu0 0.0
  %1409 = vmatmul.mubr.f32.gmra.mrb[0].mxu0 %v1342
  %v1410 = vpop.f32.mrb[0].mxu0
  %v1411 = vadd.f32 %v1266, %v1410
  %v1412 = vpop.f32.mrb[0].mxu0
  %v1413 = vadd.f32 %v1268, %v1412
  %1414 = vdwg.mxu0
  %1415 = vmatprep.subr.mxu0 %v1129
  %1416 = vmatpush1.msra.mxu0 %v1128
  %1417 = vmatprep.subr.mxu0 %v1145
  %1418 = vmatpush1.msra.mxu0 %v1144
  %1419 = vmatprep.subr.mxu0 %v1161
  %1420 = vmatpush1.msra.mxu0 %v1160
  %1421 = vmatprep.subr.mxu0 0.0
  %1422 = vmatpush1.msra.mxu0 0.0
  %1423 = vmatprep.subr.mxu0 0.0
  %1424 = vmatpush1.msra.mxu0 0.0
  %1425 = vmatprep.subr.mxu0 0.0
  %1426 = vmatpush1.msra.mxu0 0.0
  %1427 = vmatprep.subr.mxu0 0.0
  %1428 = vmatpush1.msra.mxu0 0.0
  %1429 = vmatprep.subr.mxu0 0.0
  %1430 = vmatpush1.msra.mxu0 0.0
  %1431 = vmatprep.subr.mxu0 0.0
  %1432 = vmatpush1.msra.mxu0 0.0
  %1433 = vmatprep.subr.mxu0 0.0
  %1434 = vmatpush1.msra.mxu0 0.0
  %1435 = vmatprep.subr.mxu0 0.0
  %1436 = vmatpush1.msra.mxu0 0.0
  %1437 = vmatprep.subr.mxu0 0.0
  %1438 = vmatpush1.msra.mxu0 0.0
  %1439 = vmatprep.subr.mxu0 0.0
  %1440 = vmatpush1.msra.mxu0 0.0
  %1441 = vmatprep.subr.mxu0 0.0
  %1442 = vmatpush1.msra.mxu0 0.0
  %1443 = vmatprep.subr.mxu0 0.0
  %1444 = vmatpush1.msra.mxu0 0.0
  %1445 = vmatprep.subr.mxu0 0.0
  %1446 = vmatpush1.msra.mxu0 0.0
  %1447 = vmatprep.subr.mxu0 0.0
  %1448 = vmatpush1.msra.mxu0 0.0
  %1449 = vmatprep.subr.mxu0 0.0
  %1450 = vmatpush1.msra.mxu0 0.0
  %1451 = vmatprep.subr.mxu0 0.0
  %1452 = vmatpush1.msra.mxu0 0.0
  %1453 = vmatprep.subr.mxu0 0.0
  %1454 = vmatpush1.msra.mxu0 0.0
  %1455 = vmatprep.subr.mxu0 0.0
  %1456 = vmatpush1.msra.mxu0 0.0
  %1457 = vmatprep.subr.mxu0 0.0
  %1458 = vmatpush1.msra.mxu0 0.0
  %1459 = vmatprep.subr.mxu0 0.0
  %1460 = vmatpush1.msra.mxu0 0.0
  %1461 = vmatprep.subr.mxu0 0.0
  %1462 = vmatpush1.msra.mxu0 0.0
  %1463 = vmatprep.subr.mxu0 0.0
  %1464 = vmatpush1.msra.mxu0 0.0
  %1465 = vmatprep.subr.mxu0 0.0
  %1466 = vmatpush1.msra.mxu0 0.0
  %1467 = vmatprep.subr.mxu0 0.0
  %1468 = vmatpush1.msra.mxu0 0.0
  %1469 = vmatprep.subr.mxu0 0.0
  %1470 = vmatpush1.msra.mxu0 0.0
  %1471 = vmatprep.subr.mxu0 0.0
  %1472 = vmatpush1.msra.mxu0 0.0
  %1473 = vmatprep.subr.mxu0 0.0
  %1474 = vmatpush1.msra.mxu0 0.0
  %1475 = vmatprep.subr.mxu0 0.0
  %1476 = vmatpush1.msra.mxu0 0.0
  %1477 = vmatprep.subr.mxu0 0.0
  %1478 = vmatpush1.msra.mxu0 0.0
  %1479 = vmatprep.mubr.f32.mxu0 0.0
  %1480 = vmatmul.mubr.f32.gmra.mrb[0].mxu0 %v1342
  %v1481 = vpop.f32.mrb[0].mxu0
  %v1482 = vadd.f32 %v1337, %v1481
  %v1483 = vpop.f32.mrb[0].mxu0
  %v1484 = vadd.f32 %v1339, %v1483
  %1485 = vdwg.mxu0
  %1486 = vrot.lane.b32.xlu0 %v1110, 113
  %v1487 = vpop.permute.xlu0 %1486
  %1488 = vrot.lane.b32.xlu0 %v1111, 113
  %v1489 = vpop.permute.xlu0 %1488
  %1490 = vrot.lane.b32.xlu0 %v1112, 113
  %v1491 = vpop.permute.xlu0 %1490
  %1492 = vrot.lane.b32.xlu0 %v1113, 113
  %v1493 = vpop.permute.xlu0 %1492
  %v1494 = vsel %vm533, %v1491, %v1493
  %v1495 = vsel %vm533, %v1489, %v1491
  %v1496 = vsel %vm533, %v1487, %v1489
  %v1497 = vsel %vm533, %v1493, %v1487
  %v1498 = vmul.f32 %v1496, %v544
  %v1499 = vmul.f32 %v1495, %v548
  %v1500 = vmul.f32 %v1494, %v552
  %v1501 = vmul.f32 %v1497, %v556
  %1502 = vrot.lane.b32.xlu0 %v1110, 112
  %v1503 = vpop.permute.xlu0 %1502
  %1504 = vrot.lane.b32.xlu0 %v1111, 112
  %v1505 = vpop.permute.xlu0 %1504
  %1506 = vrot.lane.b32.xlu0 %v1112, 112
  %v1507 = vpop.permute.xlu0 %1506
  %1508 = vrot.lane.b32.xlu0 %v1113, 112
  %v1509 = vpop.permute.xlu0 %1508
  %v1510 = vsel %vm573, %v1507, %v1509
  %v1511 = vsel %vm573, %v1505, %v1507
  %v1512 = vsel %vm573, %v1503, %v1505
  %v1513 = vsel %vm573, %v1509, %v1503
  %v1514 = vmul.f32 %v1512, %v584
  %v1515 = vmul.f32 %v1511, %v588
  %v1516 = vmul.f32 %v1510, %v592
  %v1517 = vmul.f32 %v1513, %v596
  %1518 = vrot.lane.b32.xlu0 %v1110, 111
  %v1519 = vpop.permute.xlu0 %1518
  %1520 = vrot.lane.b32.xlu0 %v1111, 111
  %v1521 = vpop.permute.xlu0 %1520
  %1522 = vrot.lane.b32.xlu0 %v1112, 111
  %v1523 = vpop.permute.xlu0 %1522
  %1524 = vrot.lane.b32.xlu0 %v1113, 111
  %v1525 = vpop.permute.xlu0 %1524
  %v1526 = vsel %vm613, %v1523, %v1525
  %v1527 = vsel %vm613, %v1521, %v1523
  %v1528 = vsel %vm613, %v1519, %v1521
  %v1529 = vsel %vm613, %v1525, %v1519
  %v1530 = vmul.f32 %v1528, %v624
  %v1531 = vmul.f32 %v1527, %v628
  %v1532 = vmul.f32 %v1526, %v632
  %v1533 = vmul.f32 %v1529, %v636
  %v1534 = vld [vmem:[%s1 + $0x28] sm:$0xff]
  %v1536 = vsel %vm234, %v1534, 0
  %1538 = vmatprep.subr.mxu0 %v1499
  %1539 = vmatpush1.msra.mxu0 %v1498
  %1540 = vmatprep.subr.mxu0 %v1515
  %1541 = vmatpush1.msra.mxu0 %v1514
  %1542 = vmatprep.subr.mxu0 %v1531
  %1543 = vmatpush1.msra.mxu0 %v1530
  %1544 = vmatprep.subr.mxu0 0.0
  %1545 = vmatpush1.msra.mxu0 0.0
  %1546 = vmatprep.subr.mxu0 0.0
  %1547 = vmatpush1.msra.mxu0 0.0
  %1548 = vmatprep.subr.mxu0 0.0
  %1549 = vmatpush1.msra.mxu0 0.0
  %1550 = vmatprep.subr.mxu0 0.0
  %1551 = vmatpush1.msra.mxu0 0.0
  %1552 = vmatprep.subr.mxu0 0.0
  %1553 = vmatpush1.msra.mxu0 0.0
  %1554 = vmatprep.subr.mxu0 0.0
  %1555 = vmatpush1.msra.mxu0 0.0
  %1556 = vmatprep.subr.mxu0 0.0
  %1557 = vmatpush1.msra.mxu0 0.0
  %1558 = vmatprep.subr.mxu0 0.0
  %1559 = vmatpush1.msra.mxu0 0.0
  %1560 = vmatprep.subr.mxu0 0.0
  %1561 = vmatpush1.msra.mxu0 0.0
  %1562 = vmatprep.subr.mxu0 0.0
  %1563 = vmatpush1.msra.mxu0 0.0
  %1564 = vmatprep.subr.mxu0 0.0
  %1565 = vmatpush1.msra.mxu0 0.0
  %1566 = vmatprep.subr.mxu0 0.0
  %1567 = vmatpush1.msra.mxu0 0.0
  %1568 = vmatprep.subr.mxu0 0.0
  %1569 = vmatpush1.msra.mxu0 0.0
  %1570 = vmatprep.subr.mxu0 0.0
  %1571 = vmatpush1.msra.mxu0 0.0
  %1572 = vmatprep.subr.mxu0 0.0
  %1573 = vmatpush1.msra.mxu0 0.0
  %1574 = vmatprep.subr.mxu0 0.0
  %1575 = vmatpush1.msra.mxu0 0.0
  %1576 = vmatprep.subr.mxu0 0.0
  %1577 = vmatpush1.msra.mxu0 0.0
  %1578 = vmatprep.subr.mxu0 0.0
  %1579 = vmatpush1.msra.mxu0 0.0
  %1580 = vmatprep.subr.mxu0 0.0
  %1581 = vmatpush1.msra.mxu0 0.0
  %1582 = vmatprep.subr.mxu0 0.0
  %1583 = vmatpush1.msra.mxu0 0.0
  %1584 = vmatprep.subr.mxu0 0.0
  %1585 = vmatpush1.msra.mxu0 0.0
  %1586 = vmatprep.subr.mxu0 0.0
  %1587 = vmatpush1.msra.mxu0 0.0
  %1588 = vmatprep.subr.mxu0 0.0
  %1589 = vmatpush1.msra.mxu0 0.0
  %1590 = vmatprep.subr.mxu0 0.0
  %1591 = vmatpush1.msra.mxu0 0.0
  %1592 = vmatprep.subr.mxu0 0.0
  %1593 = vmatpush1.msra.mxu0 0.0
  %1594 = vmatprep.subr.mxu0 0.0
  %1595 = vmatpush1.msra.mxu0 0.0
  %1596 = vmatprep.subr.mxu0 0.0
  %1597 = vmatpush1.msra.mxu0 0.0
  %1598 = vmatprep.subr.mxu0 0.0
  %1599 = vmatpush1.msra.mxu0 0.0
  %1600 = vmatprep.subr.mxu0 0.0
  %1601 = vmatpush1.msra.mxu0 0.0
  %1602 = vmatprep.mubr.f32.mxu0 0.0
  %1603 = vmatmul.mubr.f32.gmra.mrb[0].mxu0 %v1536
  %v1604 = vpop.f32.mrb[0].mxu0
  %v1605 = vadd.f32 0.0, %v1604
  %v1606 = vpop.f32.mrb[0].mxu0
  %v1607 = vadd.f32 0.0, %v1606
  %1608 = vdwg.mxu0
  %1609 = vmatprep.subr.mxu0 %v1501
  %1610 = vmatpush1.msra.mxu0 %v1500
  %1611 = vmatprep.subr.mxu0 %v1517
  %1612 = vmatpush1.msra.mxu0 %v1516
  %1613 = vmatprep.subr.mxu0 %v1533
  %1614 = vmatpush1.msra.mxu0 %v1532
  %1615 = vmatprep.subr.mxu0 0.0
  %1616 = vmatpush1.msra.mxu0 0.0
  %1617 = vmatprep.subr.mxu0 0.0
  %1618 = vmatpush1.msra.mxu0 0.0
  %1619 = vmatprep.subr.mxu0 0.0
  %1620 = vmatpush1.msra.mxu0 0.0
  %1621 = vmatprep.subr.mxu0 0.0
  %1622 = vmatpush1.msra.mxu0 0.0
  %1623 = vmatprep.subr.mxu0 0.0
  %1624 = vmatpush1.msra.mxu0 0.0
  %1625 = vmatprep.subr.mxu0 0.0
  %1626 = vmatpush1.msra.mxu0 0.0
  %1627 = vmatprep.subr.mxu0 0.0
  %1628 = vmatpush1.msra.mxu0 0.0
  %1629 = vmatprep.subr.mxu0 0.0
  %1630 = vmatpush1.msra.mxu0 0.0
  %1631 = vmatprep.subr.mxu0 0.0
  %1632 = vmatpush1.msra.mxu0 0.0
  %1633 = vmatprep.subr.mxu0 0.0
  %1634 = vmatpush1.msra.mxu0 0.0
  %1635 = vmatprep.subr.mxu0 0.0
  %1636 = vmatpush1.msra.mxu0 0.0
  %1637 = vmatprep.subr.mxu0 0.0
  %1638 = vmatpush1.msra.mxu0 0.0
  %1639 = vmatprep.subr.mxu0 0.0
  %1640 = vmatpush1.msra.mxu0 0.0
  %1641 = vmatprep.subr.mxu0 0.0
  %1642 = vmatpush1.msra.mxu0 0.0
  %1643 = vmatprep.subr.mxu0 0.0
  %1644 = vmatpush1.msra.mxu0 0.0
  %1645 = vmatprep.subr.mxu0 0.0
  %1646 = vmatpush1.msra.mxu0 0.0
  %1647 = vmatprep.subr.mxu0 0.0
  %1648 = vmatpush1.msra.mxu0 0.0
  %1649 = vmatprep.subr.mxu0 0.0
  %1650 = vmatpush1.msra.mxu0 0.0
  %1651 = vmatprep.subr.mxu0 0.0
  %1652 = vmatpush1.msra.mxu0 0.0
  %1653 = vmatprep.subr.mxu0 0.0
  %1654 = vmatpush1.msra.mxu0 0.0
  %1655 = vmatprep.subr.mxu0 0.0
  %1656 = vmatpush1.msra.mxu0 0.0
  %1657 = vmatprep.subr.mxu0 0.0
  %1658 = vmatpush1.msra.mxu0 0.0
  %1659 = vmatprep.subr.mxu0 0.0
  %1660 = vmatpush1.msra.mxu0 0.0
  %1661 = vmatprep.subr.mxu0 0.0
  %1662 = vmatpush1.msra.mxu0 0.0
  %1663 = vmatprep.subr.mxu0 0.0
  %1664 = vmatpush1.msra.mxu0 0.0
  %1665 = vmatprep.subr.mxu0 0.0
  %1666 = vmatpush1.msra.mxu0 0.0
  %1667 = vmatprep.subr.mxu0 0.0
  %1668 = vmatpush1.msra.mxu0 0.0
  %1669 = vmatprep.subr.mxu0 0.0
  %1670 = vmatpush1.msra.mxu0 0.0
  %1671 = vmatprep.subr.mxu0 0.0
  %1672 = vmatpush1.msra.mxu0 0.0
  %1673 = vmatprep.mubr.f32.mxu0 0.0
  %1674 = vmatmul.mubr.f32.gmra.mrb[0].mxu0 %v1536
  %v1675 = vpop.f32.mrb[0].mxu0
  %v1676 = vadd.f32 0.0, %v1675
  %v1677 = vpop.f32.mrb[0].mxu0
  %v1678 = vadd.f32 0.0, %v1677
  %1679 = vdwg.mxu0
  %v1680 = vadd.f32 %v1411, %v1605
  %v1681 = vadd.f32 %v1413, %v1607
  %v1682 = vadd.f32 %v1482, %v1676
  %v1683 = vadd.f32 %v1484, %v1678
  %1684 = vmatprep.subr.mxu0 0.0
  %1685 = vmatpush1.msra.mxu0 1.0
  %1686 = vmatprep.subr.mxu0 0.0
  %1687 = vmatpush1.msra.mxu0 1.0
  %1688 = vmatprep.subr.mxu0 0.0
  %1689 = vmatpush1.msra.mxu0 1.0
  %1690 = vmatprep.subr.mxu0 0.0
  %1691 = vmatpush1.msra.mxu0 1.0
  %1692 = vmatprep.subr.mxu0 0.0
  %1693 = vmatpush1.msra.mxu0 1.0
  %1694 = vmatprep.subr.mxu0 0.0
  %1695 = vmatpush1.msra.mxu0 1.0
  %1696 = vmatprep.subr.mxu0 0.0
  %1697 = vmatpush1.msra.mxu0 1.0
  %1698 = vmatprep.subr.mxu0 0.0
  %1699 = vmatpush1.msra.mxu0 1.0
  %1700 = vmatprep.subr.mxu0 0.0
  %1701 = vmatpush1.msra.mxu0 1.0
  %1702 = vmatprep.subr.mxu0 0.0
  %1703 = vmatpush1.msra.mxu0 1.0
  %1704 = vmatprep.subr.mxu0 0.0
  %1705 = vmatpush1.msra.mxu0 1.0
  %1706 = vmatprep.subr.mxu0 0.0
  %1707 = vmatpush1.msra.mxu0 1.0
  %1708 = vmatprep.subr.mxu0 0.0
  %1709 = vmatpush1.msra.mxu0 1.0
  %1710 = vmatprep.subr.mxu0 0.0
  %1711 = vmatpush1.msra.mxu0 1.0
  %1712 = vmatprep.subr.mxu0 0.0
  %1713 = vmatpush1.msra.mxu0 1.0
  %1714 = vmatprep.subr.mxu0 0.0
  %1715 = vmatpush1.msra.mxu0 1.0
  %1716 = vmatprep.subr.mxu0 0.0
  %1717 = vmatpush1.msra.mxu0 1.0
  %1718 = vmatprep.subr.mxu0 0.0
  %1719 = vmatpush1.msra.mxu0 1.0
  %1720 = vmatprep.subr.mxu0 0.0
  %1721 = vmatpush1.msra.mxu0 1.0
  %1722 = vmatprep.subr.mxu0 0.0
  %1723 = vmatpush1.msra.mxu0 1.0
  %1724 = vmatprep.subr.mxu0 0.0
  %1725 = vmatpush1.msra.mxu0 1.0
  %1726 = vmatprep.subr.mxu0 0.0
  %1727 = vmatpush1.msra.mxu0 1.0
  %1728 = vmatprep.subr.mxu0 0.0
  %1729 = vmatpush1.msra.mxu0 1.0
  %1730 = vmatprep.subr.mxu0 0.0
  %1731 = vmatpush1.msra.mxu0 1.0
  %1732 = vmatprep.subr.mxu0 0.0
  %1733 = vmatpush1.msra.mxu0 1.0
  %1734 = vmatprep.subr.mxu0 0.0
  %1735 = vmatpush1.msra.mxu0 1.0
  %1736 = vmatprep.subr.mxu0 0.0
  %1737 = vmatpush1.msra.mxu0 1.0
  %1738 = vmatprep.subr.mxu0 0.0
  %1739 = vmatpush1.msra.mxu0 1.0
  %1740 = vmatprep.subr.mxu0 0.0
  %1741 = vmatpush1.msra.mxu0 1.0
  %1742 = vmatprep.subr.mxu0 0.0
  %1743 = vmatpush1.msra.mxu0 1.0
  %1744 = vmatprep.subr.mxu0 0.0
  %1745 = vmatpush1.msra.mxu0 1.0
  %1746 = vmatprep.subr.mxu0 0.0
  %1747 = vmatpush1.msra.mxu0 1.0
  %1748 = vmatprep.mubr.f32.mxu0 %v1681
  %1749 = vmatmul.mubr.f32.gmra.mrb[0].mxu0 %v1680
  %v1750 = vpop.f32.mrb[0].mxu0
  %v1751 = vadd.f32 0.0, %v1750
  %v1752 = vpop.f32.mrb[0].mxu0
  %1753 = vdwg.mxu0
  %1754 = vmatprep.subr.mxu0 0.0
  %1755 = vmatpush1.msra.mxu0 1.0
  %1756 = vmatprep.subr.mxu0 0.0
  %1757 = vmatpush1.msra.mxu0 1.0
  %1758 = vmatprep.subr.mxu0 0.0
  %1759 = vmatpush1.msra.mxu0 1.0
  %1760 = vmatprep.subr.mxu0 0.0
  %1761 = vmatpush1.msra.mxu0 1.0
  %1762 = vmatprep.subr.mxu0 0.0
  %1763 = vmatpush1.msra.mxu0 1.0
  %1764 = vmatprep.subr.mxu0 0.0
  %1765 = vmatpush1.msra.mxu0 1.0
  %1766 = vmatprep.subr.mxu0 0.0
  %1767 = vmatpush1.msra.mxu0 1.0
  %1768 = vmatprep.subr.mxu0 0.0
  %1769 = vmatpush1.msra.mxu0 1.0
  %1770 = vmatprep.subr.mxu0 0.0
  %1771 = vmatpush1.msra.mxu0 1.0
  %1772 = vmatprep.subr.mxu0 0.0
  %1773 = vmatpush1.msra.mxu0 1.0
  %1774 = vmatprep.subr.mxu0 0.0
  %1775 = vmatpush1.msra.mxu0 1.0
  %1776 = vmatprep.subr.mxu0 0.0
  %1777 = vmatpush1.msra.mxu0 1.0
  %1778 = vmatprep.subr.mxu0 0.0
  %1779 = vmatpush1.msra.mxu0 1.0
  %1780 = vmatprep.subr.mxu0 0.0
  %1781 = vmatpush1.msra.mxu0 1.0
  %1782 = vmatprep.subr.mxu0 0.0
  %1783 = vmatpush1.msra.mxu0 1.0
  %1784 = vmatprep.subr.mxu0 0.0
  %1785 = vmatpush1.msra.mxu0 1.0
  %1786 = vmatprep.subr.mxu0 0.0
  %1787 = vmatpush1.msra.mxu0 1.0
  %1788 = vmatprep.subr.mxu0 0.0
  %1789 = vmatpush1.msra.mxu0 1.0
  %1790 = vmatprep.subr.mxu0 0.0
  %1791 = vmatpush1.msra.mxu0 1.0
  %1792 = vmatprep.subr.mxu0 0.0
  %1793 = vmatpush1.msra.mxu0 1.0
  %1794 = vmatprep.subr.mxu0 0.0
  %1795 = vmatpush1.msra.mxu0 1.0
  %1796 = vmatprep.subr.mxu0 0.0
  %1797 = vmatpush1.msra.mxu0 1.0
  %1798 = vmatprep.subr.mxu0 0.0
  %1799 = vmatpush1.msra.mxu0 1.0
  %1800 = vmatprep.subr.mxu0 0.0
  %1801 = vmatpush1.msra.mxu0 1.0
  %1802 = vmatprep.subr.mxu0 0.0
  %1803 = vmatpush1.msra.mxu0 1.0
  %1804 = vmatprep.subr.mxu0 0.0
  %1805 = vmatpush1.msra.mxu0 1.0
  %1806 = vmatprep.subr.mxu0 0.0
  %1807 = vmatpush1.msra.mxu0 1.0
  %1808 = vmatprep.subr.mxu0 0.0
  %1809 = vmatpush1.msra.mxu0 1.0
  %1810 = vmatprep.subr.mxu0 0.0
  %1811 = vmatpush1.msra.mxu0 1.0
  %1812 = vmatprep.subr.mxu0 0.0
  %1813 = vmatpush1.msra.mxu0 1.0
  %1814 = vmatprep.subr.mxu0 0.0
  %1815 = vmatpush1.msra.mxu0 1.0
  %1816 = vmatprep.subr.mxu0 0.0
  %1817 = vmatpush1.msra.mxu0 1.0
  %1818 = vmatprep.mubr.f32.mxu0 %v1683
  %1819 = vmatmul.mubr.f32.gmra.mrb[0].mxu0 %v1682
  %v1820 = vpop.f32.mrb[0].mxu0
  %v1821 = vadd.f32 %v1751, %v1820
  %v1822 = vpop.f32.mrb[0].mxu0
  %1823 = vdwg.mxu0
  %v1824 = vmul.f32 %v1680, %v1680
  %v1825 = vmul.f32 %v1681, %v1681
  %v1826 = vmul.f32 %v1682, %v1682
  %v1827 = vmul.f32 %v1683, %v1683
  %1828 = vmatprep.subr.mxu0 0.0
  %1829 = vmatpush1.msra.mxu0 1.0
  %1830 = vmatprep.subr.mxu0 0.0
  %1831 = vmatpush1.msra.mxu0 1.0
  %1832 = vmatprep.subr.mxu0 0.0
  %1833 = vmatpush1.msra.mxu0 1.0
  %1834 = vmatprep.subr.mxu0 0.0
  %1835 = vmatpush1.msra.mxu0 1.0
  %1836 = vmatprep.subr.mxu0 0.0
  %1837 = vmatpush1.msra.mxu0 1.0
  %1838 = vmatprep.subr.mxu0 0.0
  %1839 = vmatpush1.msra.mxu0 1.0
  %1840 = vmatprep.subr.mxu0 0.0
  %1841 = vmatpush1.msra.mxu0 1.0
  %1842 = vmatprep.subr.mxu0 0.0
  %1843 = vmatpush1.msra.mxu0 1.0
  %1844 = vmatprep.subr.mxu0 0.0
  %1845 = vmatpush1.msra.mxu0 1.0
  %1846 = vmatprep.subr.mxu0 0.0
  %1847 = vmatpush1.msra.mxu0 1.0
  %1848 = vmatprep.subr.mxu0 0.0
  %1849 = vmatpush1.msra.mxu0 1.0
  %1850 = vmatprep.subr.mxu0 0.0
  %1851 = vmatpush1.msra.mxu0 1.0
  %1852 = vmatprep.subr.mxu0 0.0
  %1853 = vmatpush1.msra.mxu0 1.0
  %1854 = vmatprep.subr.mxu0 0.0
  %1855 = vmatpush1.msra.mxu0 1.0
  %1856 = vmatprep.subr.mxu0 0.0
  %1857 = vmatpush1.msra.mxu0 1.0
  %1858 = vmatprep.subr.mxu0 0.0
  %1859 = vmatpush1.msra.mxu0 1.0
  %1860 = vmatprep.subr.mxu0 0.0
  %1861 = vmatpush1.msra.mxu0 1.0
  %1862 = vmatprep.subr.mxu0 0.0
  %1863 = vmatpush1.msra.mxu0 1.0
  %1864 = vmatprep.subr.mxu0 0.0
  %1865 = vmatpush1.msra.mxu0 1.0
  %1866 = vmatprep.subr.mxu0 0.0
  %1867 = vmatpush1.msra.mxu0 1.0
  %1868 = vmatprep.subr.mxu0 0.0
  %1869 = vmatpush1.msra.mxu0 1.0
  %1870 = vmatprep.subr.mxu0 0.0
  %1871 = vmatpush1.msra.mxu0 1.0
  %1872 = vmatprep.subr.mxu0 0.0
  %1873 = vmatpush1.msra.mxu0 1.0
  %1874 = vmatprep.subr.mxu0 0.0
  %1875 = vmatpush1.msra.mxu0 1.0
  %1876 = vmatprep.subr.mxu0 0.0
  %1877 = vmatpush1.msra.mxu0 1.0
  %1878 = vmatprep.subr.mxu0 0.0
  %1879 = vmatpush1.msra.mxu0 1.0
  %1880 = vmatprep.subr.mxu0 0.0
  %1881 = vmatpush1.msra.mxu0 1.0
  %1882 = vmatprep.subr.mxu0 0.0
  %1883 = vmatpush1.msra.mxu0 1.0
  %1884 = vmatprep.subr.mxu0 0.0
  %1885 = vmatpush1.msra.mxu0 1.0
  %1886 = vmatprep.subr.mxu0 0.0
  %1887 = vmatpush1.msra.mxu0 1.0
  %1888 = vmatprep.subr.mxu0 0.0
  %1889 = vmatpush1.msra.mxu0 1.0
  %1890 = vmatprep.subr.mxu0 0.0
  %1891 = vmatpush1.msra.mxu0 1.0
  %1892 = vmatprep.mubr.f32.mxu0 %v1825
  %1893 = vmatmul.mubr.f32.gmra.mrb[0].mxu0 %v1824
  %v1894 = vpop.f32.mrb[0].mxu0
  %v1895 = vadd.f32 0.0, %v1894
  %v1896 = vpop.f32.mrb[0].mxu0
  %1897 = vdwg.mxu0
  %1898 = vmatprep.subr.mxu0 0.0
  %1899 = vmatpush1.msra.mxu0 1.0
  %1900 = vmatprep.subr.mxu0 0.0
  %1901 = vmatpush1.msra.mxu0 1.0
  %1902 = vmatprep.subr.mxu0 0.0
  %1903 = vmatpush1.msra.mxu0 1.0
  %1904 = vmatprep.subr.mxu0 0.0
  %1905 = vmatpush1.msra.mxu0 1.0
  %1906 = vmatprep.subr.mxu0 0.0
  %1907 = vmatpush1.msra.mxu0 1.0
  %1908 = vmatprep.subr.mxu0 0.0
  %1909 = vmatpush1.msra.mxu0 1.0
  %1910 = vmatprep.subr.mxu0 0.0
  %1911 = vmatpush1.msra.mxu0 1.0
  %1912 = vmatprep.subr.mxu0 0.0
  %1913 = vmatpush1.msra.mxu0 1.0
  %1914 = vmatprep.subr.mxu0 0.0
  %1915 = vmatpush1.msra.mxu0 1.0
  %1916 = vmatprep.subr.mxu0 0.0
  %1917 = vmatpush1.msra.mxu0 1.0
  %1918 = vmatprep.subr.mxu0 0.0
  %1919 = vmatpush1.msra.mxu0 1.0
  %1920 = vmatprep.subr.mxu0 0.0
  %1921 = vmatpush1.msra.mxu0 1.0
  %1922 = vmatprep.subr.mxu0 0.0
  %1923 = vmatpush1.msra.mxu0 1.0
  %1924 = vmatprep.subr.mxu0 0.0
  %1925 = vmatpush1.msra.mxu0 1.0
  %1926 = vmatprep.subr.mxu0 0.0
  %1927 = vmatpush1.msra.mxu0 1.0
  %1928 = vmatprep.subr.mxu0 0.0
  %1929 = vmatpush1.msra.mxu0 1.0
  %1930 = vmatprep.subr.mxu0 0.0
  %1931 = vmatpush1.msra.mxu0 1.0
  %1932 = vmatprep.subr.mxu0 0.0
  %1933 = vmatpush1.msra.mxu0 1.0
  %1934 = vmatprep.subr.mxu0 0.0
  %1935 = vmatpush1.msra.mxu0 1.0
  %1936 = vmatprep.subr.mxu0 0.0
  %1937 = vmatpush1.msra.mxu0 1.0
  %1938 = vmatprep.subr.mxu0 0.0
  %1939 = vmatpush1.msra.mxu0 1.0
  %1940 = vmatprep.subr.mxu0 0.0
  %1941 = vmatpush1.msra.mxu0 1.0
  %1942 = vmatprep.subr.mxu0 0.0
  %1943 = vmatpush1.msra.mxu0 1.0
  %1944 = vmatprep.subr.mxu0 0.0
  %1945 = vmatpush1.msra.mxu0 1.0
  %1946 = vmatprep.subr.mxu0 0.0
  %1947 = vmatpush1.msra.mxu0 1.0
  %1948 = vmatprep.subr.mxu0 0.0
  %1949 = vmatpush1.msra.mxu0 1.0
  %1950 = vmatprep.subr.mxu0 0.0
  %1951 = vmatpush1.msra.mxu0 1.0
  %1952 = vmatprep.subr.mxu0 0.0
  %1953 = vmatpush1.msra.mxu0 1.0
  %1954 = vmatprep.subr.mxu0 0.0
  %1955 = vmatpush1.msra.mxu0 1.0
  %1956 = vmatprep.subr.mxu0 0.0
  %1957 = vmatpush1.msra.mxu0 1.0
  %1958 = vmatprep.subr.mxu0 0.0
  %1959 = vmatpush1.msra.mxu0 1.0
  %1960 = vmatprep.subr.mxu0 0.0
  %1961 = vmatpush1.msra.mxu0 1.0
  %1962 = vmatprep.mubr.f32.mxu0 %v1827
  %1963 = vmatmul.mubr.f32.gmra.mrb[0].mxu0 %v1826
  %v1964 = vpop.f32.mrb[0].mxu0
  %v1965 = vadd.f32 %v1895, %v1964
  %v1966 = vpop.f32.mrb[0].mxu0
  %1967 = vdwg.mxu0
  %v1968 = vmul.f32 %v1821, 0.001953125
  %v1969 = vmul.f32 %v1965, 0.001953125
  %v1970 = vmul.f32 %v1968, %v1968
  %v1971 = vsub.f32 %v1969, %v1970
  %v1972 = vadd.f32 %v1971, 1e-05
  %v1973 = vrsqrt.pop %v1972
  %1975 = vrot.lane.b32.xlu0 %v1973, 2
  %v1976 = vpop.permute.xlu0 %1975
  %v1978 = vmul.f32 %v17, %v1976
  %1980 = vrot.lane.b32.xlu0 %v1978, 126
  %v1981 = vpop.permute.xlu0 %1980
  %v1983 = vmul.f32 %v1968, %v1981
  %1985 = vrot.lane.b32.xlu0 %v1983, 3
  %v1986 = vpop.permute.xlu0 %1985
  %v1988 = vsub.f32 %v17, %v1986
  %1989 = vset.pattern.permute.xlu0 2
  %1990 = vperm.xlu0 %1989, %v1978
  %v1991 = vpop.permute.xlu0 %1990
  %v1993 = vmul.f32 %v1680, %v1991
  %v1994 = vmul.f32 %v1681, %v1991
  %v1995 = vmul.f32 %v1682, %v1991
  %v1996 = vmul.f32 %v1683, %v1991
  %1998 = vset.pattern.permute.xlu0 3
  %1999 = vperm.xlu0 %1998, %v1988
  %v2000 = vpop.permute.xlu0 %1999
  %v2002 = vadd.f32 %v1993, %v2000
  %v2003 = vadd.f32 %v1994, %v2000
  %v2004 = vadd.f32 %v1995, %v2000
  %v2005 = vadd.f32 %v1996, %v2000
  %v2006 = vadd.f32 %v2002, %v27
  %v2007 = vadd.f32 %v2003, %v28
  %v2008 = vadd.f32 %v2004, %v29
  %v2009 = vadd.f32 %v2005, %v30
  %v2010 = vmax.f32 %v2006, 0.0
  %v2011 = vmax.f32 %v2007, 0.0
  %v2012 = vmax.f32 %v2008, 0.0
  %v2013 = vmax.f32 %v2009, 0.0
  %v2016 = vrot.slane %v2012, 4
  %v2017 = vrot.slane %v2013, 4
  %v2020 = vsel %vm26, %v2010, %v2016
  %v2021 = vsel %vm26, %v2011, %v2017
  %2022 = vst [vmem:[%s4] sm:$0xff] %v2020
  %2023 = vst [vmem:[%s4 + $0x8] sm:$0xff] %v2021
  // Predicated region
  $region18: #{basic_block.1} parent=0 // pred_check
    _
  $region19: #{basic_block.1} parent=0 // pred_check_branch
    %2025 = sbr.rel (0) target = $region21
  $region20: #{basic_block.1} parent=0 // pred_region
    _
  $region21: #{basic_block.1} parent=0 // pred_fallthru
    _
  // Predicated region
  $region22: #{basic_block.1} parent=0 // pred_check
    _
  $region23: #{basic_block.1} parent=0 // pred_check_branch
    %2027 = sbr.rel (0) target = $region25
  $region24: #{basic_block.1} parent=0 // pred_region
    _
  $region25: #{basic_block.1} parent=0 // pred_fallthru
    _

</llo_original>
